<compile_context>
chip_gen: v5e
topology: v5e:2x2
jax: 0.10.0
libtpu: 0.0.40
codegen_flags: <defaults>
</compile_context>

<pallas_src>
import jax
import jax.numpy as jnp
from jax.experimental import pallas as pl
from jax.experimental.pallas import tpu as pltpu


# ----------------------------------------------------------------------------
# Generation-aware budgets / block pickers
# ----------------------------------------------------------------------------
def _vmem_limit_bytes():
    """Scoped-VMEM budget: ~3/4 of physical, capped at 96 MiB (=> ~48 MiB v7x)."""
    cap = 64 * 1024 * 1024
    try:
        info = pltpu.get_tpu_info()
        cap = int(getattr(info, "vmem_capacity_bytes", cap) or cap)
    except Exception:
        pass
    return max(32 * 1024 * 1024, min(cap * 3 // 4, 96 * 1024 * 1024))


def _pick_block(n, target):
    """Largest divisor of n <= target, preferring multiples of 16 (bf16 sublane
    packing), then 8; falls back to the full dimension."""
    t = min(n, target)
    if t == n:
        return n
    for m in (16, 8):
        d = t - (t % m)
        while d >= m:
            if n % d == 0:
                return d
            d -= m
    # TODO(synk): pad N instead of falling back to a single huge tile.
    return n


def _pick_rows(n, target):
    """Largest divisor of n <= target (row-group tiling for the conv path)."""
    t = min(n, target)
    while t > 1 and n % t:
        t -= 1
    return max(t, 1)


def _stage2_tq(n, c, nkv, vmem_budget, requested):
    """Query-tile size; shrinks target so the resident kv + tiles fit VMEM."""
    if requested is not None:
        return _pick_block(n, requested)
    target = 512 if vmem_budget >= 64 * 1024 * 1024 else 256
    while True:
        tq = _pick_block(n, target)
        kv_bytes = 2 * (nkv * 2 * c) * 2          # double-buffered bf16 kv block
        xo_bytes = 2 * tq * c * 2 + 2 * tq * c * 4  # x tiles (bf16) + out tiles (f32)
        w_bytes = 2 * c * c * 2 + c * 4             # wq + wproj (bf16) + bias
        if kv_bytes + xo_bytes + w_bytes <= vmem_budget or target <= 64:
            return tq
        target //= 2


# ----------------------------------------------------------------------------
# Stage 1 kernels: fused KV producer (bf16 output)
# ----------------------------------------------------------------------------
def _make_kv_conv_kernel(eps):
    """sr>1: conv(k=s=sr) + LayerNorm + fused KV projection, no patch tensor."""
    def kernel(x_ref, wsr_ref, bsr_ref, gamma_ref, beta_ref, wkv_ref, kv_ref):
        # x_ref : (1, rt, sr, Wr, sr*C) bf16   (free reshape of x)
        # kv_ref: (1, rt, Wr, 2C)       bf16
        rt, sr = x_ref.shape[1], x_ref.shape[2]
        wr, c = x_ref.shape[3], wkv_ref.shape[0]
        for r in range(rt):
            acc = jnp.zeros((wr, c), jnp.float32)
            for ki in range(sr):
                # (Wr, sr*C) @ (sr*C, C): one ki-row of the conv, f32 accumulate.
                acc = acc + jnp.dot(x_ref[0, r, ki], wsr_ref[ki],
                                    preferred_element_type=jnp.float32)
            acc = acc + bsr_ref[...]
            # LayerNorm over channels (f32).
            mu = jnp.mean(acc, axis=-1, keepdims=True)
            var = jnp.mean(jnp.square(acc - mu), axis=-1, keepdims=True)
            xr = (acc - mu) * jax.lax.rsqrt(var + eps)
            xr = (xr * gamma_ref[...] + beta_ref[...]).astype(jnp.bfloat16)
            # Fused K|V projection: one matmul, one lane-dense 2C-wide store.
            kv_ref[0, r] = jnp.dot(xr, wkv_ref[...],
                                   preferred_element_type=jnp.float32
                                   ).astype(kv_ref.dtype)
    return kernel


def _kv_dense_kernel(x_ref, wkv_ref, kv_ref):
    """sr==1: kv = x @ Wkv (fused K|V), bf16 in / bf16 out, f32 accumulation."""
    kv_ref[0] = jnp.dot(x_ref[0], wkv_ref[...],
                        preferred_element_type=jnp.float32).astype(kv_ref.dtype)


# ----------------------------------------------------------------------------
# Stage 2 kernel: per-query-tile attention, fused per-head output projection
# ----------------------------------------------------------------------------
def _make_attn_kernel(num_heads, head_dim):
    C = num_heads * head_dim

    def kernel(x_ref, kv_ref, wq_ref, wproj_ref, bproj_ref, o_ref):
        tq = x_ref.shape[1]
        x = x_ref[0]                     # (Tq, C)   bf16
        kv = kv_ref[0]                   # (Nkv, 2C) bf16, VMEM-resident per batch
        o = jnp.zeros((tq, C), jnp.float32)
        for h in range(num_heads):
            lo = h * head_dim
            # q_h = x @ Wq_h (scale pre-folded into Wq_h in the wrapper).
            qh = jnp.dot(x, wq_ref[h],
                         preferred_element_type=jnp.float32).astype(jnp.bfloat16)
            kh = kv[:, lo:lo + head_dim]                 # (Nkv, hd)
            vh = kv[:, C + lo:C + lo + head_dim]         # (Nkv, hd)
            s = jax.lax.dot_general(qh, kh, (((1,), (1,)), ((), ())),
                                    preferred_element_type=jnp.float32)
            s = s - jnp.max(s, axis=-1, keepdims=True)
            p = jnp.exp(s)                               # unnormalized probs
            l = jnp.sum(p, axis=-1, keepdims=True)
            # attn_drop / proj_drop are Dropout(0.0) -> identity.
            oh = jnp.dot(p.astype(jnp.bfloat16), vh,
                         preferred_element_type=jnp.float32)   # (Tq, hd)
            # Deferred softmax normalization on the small (Tq, hd) result.
            oh = oh * pl.reciprocal(l, approx=True)
            # Fused per-head output projection -> full-width (Tq, C) accumulate.
            o = o + jnp.dot(oh.astype(jnp.bfloat16), wproj_ref[h],
                            preferred_element_type=jnp.float32)
        o_ref[0] = (o + bproj_ref[...]).astype(o_ref.dtype)

    return kernel


# ----------------------------------------------------------------------------
# Wrapper: parameter plumbing + the two pallas_calls
# ----------------------------------------------------------------------------
def attention_pallas(x, H, W, params, *, num_heads, sr_ratio, eps=1e-5,
                     block_q=None, block_kv=None):
    B, N, C = x.shape
    assert N == H * W and C % num_heads == 0
    head_dim = C // num_heads
    scale = head_dim ** -0.5
    bf16, f32 = jnp.bfloat16, jnp.float32
    vlim = _vmem_limit_bytes()

    # bf16 activations / weights (half the DMA bytes); f32 accumulation in-kernel.
    x_bf = x.astype(bf16)
    wkv = params["wkv"].astype(bf16)                                  # (C, 2C) fused K|V
    wq_h = (params["wq"] * scale).reshape(C, num_heads, head_dim)     # fold softmax scale
    wq_h = wq_h.transpose(1, 0, 2).astype(bf16)                       # (nh, C, hd)
    wproj_h = params["wproj"].reshape(num_heads, head_dim, C).astype(bf16)
    bproj = params["bproj"].reshape(1, C).astype(f32)

    # ---------------- Stage 1: fused kv = [K | V] ----------------------------
    if sr_ratio > 1:
        sr = sr_ratio
        assert H % sr == 0 and W % sr == 0
        Hr, Wr = H // sr, W // sr
        Nkv = Hr * Wr
        src = sr * C
        # Free contiguous reshape (no HBM transpose / patch materialization).
        x5 = x_bf.reshape(B, Hr, sr, Wr, src)
        # Conv weight (Cout, Cin, kh, kw) -> per-ki matmul weights (sr, sr*C, C)
        # with rows ordered (kj, cin) to match the reshaped x rows.
        wsr = params["conv_w"].transpose(2, 3, 1, 0).reshape(sr, src, C).astype(bf16)
        rt = _pick_rows(Hr, block_kv or 8)
        kv4 = pl.pallas_call(
            _make_kv_conv_kernel(eps),
            out_shape=jax.ShapeDtypeStruct((B, Hr, Wr, 2 * C), bf16),
            grid=(B, Hr // rt),
            in_specs=[
                pl.BlockSpec((1, rt, sr, Wr, src), lambda b, i: (b, i, 0, 0, 0)),
                pl.BlockSpec((sr, src, C), lambda b, i: (0, 0, 0)),
                pl.BlockSpec((1, C), lambda b, i: (0, 0)),
                pl.BlockSpec((1, C), lambda b, i: (0, 0)),
                pl.BlockSpec((1, C), lambda b, i: (0, 0)),
                pl.BlockSpec((C, 2 * C), lambda b, i: (0, 0)),
            ],
            out_specs=pl.BlockSpec((1, rt, Wr, 2 * C), lambda b, i: (b, i, 0, 0)),
            compiler_params=pltpu.CompilerParams(
                dimension_semantics=("parallel", "parallel"),
                vmem_limit_bytes=vlim),
        )(x5, wsr,
          params["conv_b"].reshape(1, C).astype(f32),
          params["gamma"].reshape(1, C).astype(f32),
          params["beta"].reshape(1, C).astype(f32),
          wkv)
        kv = kv4.reshape(B, Nkv, 2 * C)          # free reshape
    else:
        Nkv = N
        tkv = _pick_block(N, block_kv or 512)
        kv = pl.pallas_call(
            _kv_dense_kernel,
            out_shape=jax.ShapeDtypeStruct((B, N, 2 * C), bf16),
            grid=(B, N // tkv),
            in_specs=[pl.BlockSpec((1, tkv, C), lambda b, i: (b, i, 0)),
                      pl.BlockSpec((C, 2 * C), lambda b, i: (0, 0))],
            out_specs=pl.BlockSpec((1, tkv, 2 * C), lambda b, i: (b, i, 0)),
            compiler_params=pltpu.CompilerParams(
                dimension_semantics=("parallel", "parallel"),
                vmem_limit_bytes=vlim),
        )(x_bf, wkv)

    # ---------------- Stage 2: attention over query tiles --------------------
    tq = _stage2_tq(N, C, Nkv, vlim, block_q)
    out = pl.pallas_call(
        _make_attn_kernel(num_heads, head_dim),
        out_shape=jax.ShapeDtypeStruct((B, N, C), x.dtype),
        grid=(B, N // tq),
        in_specs=[
            pl.BlockSpec((1, tq, C), lambda b, i: (b, i, 0)),          # x tile (bf16)
            pl.BlockSpec((1, Nkv, 2 * C), lambda b, i: (b, 0, 0)),     # kv resident / batch
            pl.BlockSpec((num_heads, C, head_dim), lambda b, i: (0, 0, 0)),   # Wq per head
            pl.BlockSpec((num_heads, head_dim, C), lambda b, i: (0, 0, 0)),   # Wproj per head
            pl.BlockSpec((1, C), lambda b, i: (0, 0)),                 # proj bias
        ],
        out_specs=pl.BlockSpec((1, tq, C), lambda b, i: (b, i, 0)),
        compiler_params=pltpu.CompilerParams(
            dimension_semantics=("parallel", "arbitrary"),   # batch across megacores,
            vmem_limit_bytes=vlim),                          # no duplicate K/V per core
    )(x_bf, kv, wq_h, wproj_h, bproj)
    return out


# ----------------------------------------------------------------------------
# Pure-JAX f32 reference mirroring the PyTorch forward (for validation).
# ----------------------------------------------------------------------------
def attention_ref(x, H, W, params, *, num_heads, sr_ratio, eps=1e-5):
    B, N, C = x.shape
    hd = C // num_heads
    scale = hd ** -0.5
    q = x @ params["wq"]
    if sr_ratio > 1:
        x4 = x.reshape(B, H, W, C).transpose(0, 3, 1, 2)          # NCHW
        xr = jax.lax.conv_general_dilated(
            x4, params["conv_w"], (sr_ratio, sr_ratio), "VALID",
            dimension_numbers=("NCHW", "OIHW", "NCHW"))
        xr = xr + params["conv_b"][None, :, None, None]
        xr = xr.reshape(B, C, -1).transpose(0, 2, 1)              # (B, Nr, C)
        mu = xr.mean(-1, keepdims=True)
        var = ((xr - mu) ** 2).mean(-1, keepdims=True)
        xr = (xr - mu) / jnp.sqrt(var + eps) * params["gamma"] + params["beta"]
    else:
        xr = x
    kv = xr @ params["wkv"]
    k, v = kv[..., :C], kv[..., C:]
    qh = q.reshape(B, N, num_heads, hd).transpose(0, 2, 1, 3)
    kh = k.reshape(B, -1, num_heads, hd).transpose(0, 2, 1, 3)
    vh = v.reshape(B, -1, num_heads, hd).transpose(0, 2, 1, 3)
    attn = jnp.einsum("bhqd,bhkd->bhqk", qh, kh) * scale
    attn = jax.nn.softmax(attn, axis=-1)
    out = jnp.einsum("bhqk,bhkd->bhqd", attn, vh)
    out = out.transpose(0, 2, 1, 3).reshape(B, N, C)
    return out @ params["wproj"] + params["bproj"]


def init_params(key, C, sr_ratio):
    ks = jax.random.split(key, 4)
    std = 0.02                                  # trunc_normal_(std=0.02) ~ normal
    fan_out = sr_ratio * sr_ratio * C
    return {
        # Linear weights as (in, out) == torch weight.T; biases zero-init.
        "wq": jax.random.normal(ks[0], (C, C), jnp.float32) * std,
        "wkv": jax.random.normal(ks[1], (C, 2 * C), jnp.float32) * std,
        "wproj": jax.random.normal(ks[2], (C, C), jnp.float32) * std,
        "bproj": jnp.zeros((C,), jnp.float32),
        "conv_w": jax.random.normal(ks[3], (C, C, sr_ratio, sr_ratio),
                                    jnp.float32) * jnp.sqrt(2.0 / fan_out),
        "conv_b": jnp.zeros((C,), jnp.float32),
        "gamma": jnp.ones((C,), jnp.float32),
        "beta": jnp.zeros((C,), jnp.float32),
    }


if __name__ == "__main__":
    key = jax.random.PRNGKey(0)
    B, C, H, W = 2, 32, 8, 8
    num_heads, sr_ratio, eps = 8, 2, 1e-5
    N = H * W

    kx, kp = jax.random.split(key)
    x = jax.random.normal(kx, (B, N, C), jnp.float32)
    params = init_params(kp, C, sr_ratio)

    # sr_ratio > 1 path (conv + layernorm spatial reduction), default blocks.
    out = attention_pallas(x, H, W, params, num_heads=num_heads,
                           sr_ratio=sr_ratio, eps=eps)
    out = jax.block_until_ready(out)
    ref = attention_ref(x, H, W, params, num_heads=num_heads,
                        sr_ratio=sr_ratio, eps=eps)
    err = float(jnp.max(jnp.abs(out - ref)))
    assert bool(jnp.allclose(out, ref, atol=1e-2, rtol=1e-2)), f"sr>1 mismatch {err}"

    # sr_ratio == 1 path (no spatial reduction)
    out1 = attention_pallas(x, H, W, params, num_heads=num_heads,
                            sr_ratio=1, eps=eps)
    out1 = jax.block_until_ready(out1)
    ref1 = attention_ref(x, H, W, params, num_heads=num_heads,
                         sr_ratio=1, eps=eps)
    err1 = float(jnp.max(jnp.abs(out1 - ref1)))
    assert bool(jnp.allclose(out1, ref1, atol=1e-2, rtol=1e-2)), f"sr==1 mismatch {err1}"

    print("KERNEL_OK")
</pallas_src>

<mosaic_0001>
module attributes {stable_mosaic.version = 11 : i64} {
  func.func @kernel(%arg0: i32, %arg1: i32, %arg2: memref<1x4x2x4x64xbf16, #tpu.memory_space<vmem>>, %arg3: memref<2x64x32xbf16, #tpu.memory_space<vmem>>, %arg4: memref<1x32xf32, #tpu.memory_space<vmem>>, %arg5: memref<1x32xf32, #tpu.memory_space<vmem>>, %arg6: memref<1x32xf32, #tpu.memory_space<vmem>>, %arg7: memref<32x64xbf16, #tpu.memory_space<vmem>>, %arg8: memref<1x4x4x64xbf16, #tpu.memory_space<vmem>>) attributes {dimension_semantics = [#tpu.dimension_semantics<parallel>, #tpu.dimension_semantics<parallel>], iteration_bounds = array<i64: 2, 1>, scalar_prefetch = 0 : i64, scratch_operands = 0 : i64, tpu.core_type = #tpu.core_type<tc>, window_params = [{transform_indices = @transform_0, window_bounds = array<i64: 1, 4, 2, 4, 64>}, {pipeline_mode = #tpu.pipeline_mode<synchronous>, transform_indices = @transform_1, window_bounds = array<i64: 2, 64, 32>}, {pipeline_mode = #tpu.pipeline_mode<synchronous>, transform_indices = @transform_2, window_bounds = array<i64: 1, 32>}, {pipeline_mode = #tpu.pipeline_mode<synchronous>, transform_indices = @transform_3, window_bounds = array<i64: 1, 32>}, {pipeline_mode = #tpu.pipeline_mode<synchronous>, transform_indices = @transform_4, window_bounds = array<i64: 1, 32>}, {pipeline_mode = #tpu.pipeline_mode<synchronous>, transform_indices = @transform_5, window_bounds = array<i64: 32, 64>}, {transform_indices = @transform_6, window_bounds = array<i64: 1, 4, 4, 64>}]} {
    %cst = arith.constant 0.000000e+00 : f32
    %0 = vector.broadcast %cst : f32 to vector<4x32xf32>
    %c0 = arith.constant 0 : index
    %c0_0 = arith.constant 0 : index
    %c0_1 = arith.constant 0 : index
    %c0_2 = arith.constant 0 : index
    %c0_3 = arith.constant 0 : index
    %1 = vector.load %arg2[%c0, %c0_0, %c0_1, %c0_2, %c0_3] : memref<1x4x2x4x64xbf16, #tpu.memory_space<vmem>>, vector<1x1x1x4x64xbf16>
    %2 = vector.shape_cast %1 : vector<1x1x1x4x64xbf16> to vector<4x64xbf16>
    %c0_4 = arith.constant 0 : index
    %c0_5 = arith.constant 0 : index
    %c0_6 = arith.constant 0 : index
    %3 = vector.load %arg3[%c0_4, %c0_5, %c0_6] : memref<2x64x32xbf16, #tpu.memory_space<vmem>>, vector<1x64x32xbf16>
    %4 = vector.shape_cast %3 : vector<1x64x32xbf16> to vector<64x32xbf16>
    %cst_7 = arith.constant dense<0.000000e+00> : vector<4x32xf32>
    %5 = tpu.matmul %2, %4, %cst_7 {dimension_numbers = #tpu.dot_dimension_numbers<[1], [0], [0], [1], [0, 0, 1, 1], [], []>} : vector<4x64xbf16>, vector<64x32xbf16>, vector<4x32xf32> -> vector<4x32xf32>
    %6 = arith.addf %0, %5 : vector<4x32xf32>
    %c0_8 = arith.constant 0 : index
    %c0_9 = arith.constant 0 : index
    %c1 = arith.constant 1 : index
    %c0_10 = arith.constant 0 : index
    %c0_11 = arith.constant 0 : index
    %7 = vector.load %arg2[%c0_8, %c0_9, %c1, %c0_10, %c0_11] : memref<1x4x2x4x64xbf16, #tpu.memory_space<vmem>>, vector<1x1x1x4x64xbf16>
    %8 = vector.shape_cast %7 : vector<1x1x1x4x64xbf16> to vector<4x64xbf16>
    %c1_12 = arith.constant 1 : index
    %c0_13 = arith.constant 0 : index
    %c0_14 = arith.constant 0 : index
    %9 = vector.load %arg3[%c1_12, %c0_13, %c0_14] : memref<2x64x32xbf16, #tpu.memory_space<vmem>>, vector<1x64x32xbf16>
    %10 = vector.shape_cast %9 : vector<1x64x32xbf16> to vector<64x32xbf16>
    %cst_15 = arith.constant dense<0.000000e+00> : vector<4x32xf32>
    %11 = tpu.matmul %8, %10, %cst_15 {dimension_numbers = #tpu.dot_dimension_numbers<[1], [0], [0], [1], [0, 0, 1, 1], [], []>} : vector<4x64xbf16>, vector<64x32xbf16>, vector<4x32xf32> -> vector<4x32xf32>
    %12 = arith.addf %6, %11 : vector<4x32xf32>
    %c0_16 = arith.constant 0 : index
    %c0_17 = arith.constant 0 : index
    %13 = vector.load %arg4[%c0_16, %c0_17] : memref<1x32xf32, #tpu.memory_space<vmem>>, vector<1x32xf32>
    %14 = vector.broadcast %13 : vector<1x32xf32> to vector<4x32xf32>
    %15 = arith.addf %12, %14 : vector<4x32xf32>
    %cst_18 = arith.constant dense<0.000000e+00> : vector<4xf32>
    %16 = vector.multi_reduction <add>, %15, %cst_18 [1] : vector<4x32xf32> to vector<4xf32>
    %17 = vector.shape_cast %16 : vector<4xf32> to vector<4x1xf32>
    %cst_19 = arith.constant 3.200000e+01 : f32
    %18 = vector.broadcast %cst_19 : f32 to vector<4x1xf32>
    %19 = arith.divf %17, %18 : vector<4x1xf32>
    %20 = vector.broadcast %19 : vector<4x1xf32> to vector<4x32xf32>
    %21 = arith.subf %15, %20 : vector<4x32xf32>
    %22 = arith.mulf %21, %21 : vector<4x32xf32>
    %cst_20 = arith.constant dense<0.000000e+00> : vector<4xf32>
    %23 = vector.multi_reduction <add>, %22, %cst_20 [1] : vector<4x32xf32> to vector<4xf32>
    %24 = vector.shape_cast %23 : vector<4xf32> to vector<4x1xf32>
    %cst_21 = arith.constant 3.200000e+01 : f32
    %25 = vector.broadcast %cst_21 : f32 to vector<4x1xf32>
    %26 = arith.divf %24, %25 : vector<4x1xf32>
    %27 = vector.broadcast %19 : vector<4x1xf32> to vector<4x32xf32>
    %28 = arith.subf %15, %27 : vector<4x32xf32>
    %cst_22 = arith.constant 9.99999974E-6 : f32
    %29 = vector.broadcast %cst_22 : f32 to vector<4x1xf32>
    %30 = arith.addf %26, %29 : vector<4x1xf32>
    %31 = math.rsqrt %30 : vector<4x1xf32>
    %32 = vector.broadcast %31 : vector<4x1xf32> to vector<4x32xf32>
    %33 = arith.mulf %28, %32 : vector<4x32xf32>
    %c0_23 = arith.constant 0 : index
    %c0_24 = arith.constant 0 : index
    %34 = vector.load %arg5[%c0_23, %c0_24] : memref<1x32xf32, #tpu.memory_space<vmem>>, vector<1x32xf32>
    %35 = vector.broadcast %34 : vector<1x32xf32> to vector<4x32xf32>
    %36 = arith.mulf %33, %35 : vector<4x32xf32>
    %c0_25 = arith.constant 0 : index
    %c0_26 = arith.constant 0 : index
    %37 = vector.load %arg6[%c0_25, %c0_26] : memref<1x32xf32, #tpu.memory_space<vmem>>, vector<1x32xf32>
    %38 = vector.broadcast %37 : vector<1x32xf32> to vector<4x32xf32>
    %39 = arith.addf %36, %38 : vector<4x32xf32>
    %40 = arith.truncf %39 : vector<4x32xf32> to vector<4x32xbf16>
    %c0_27 = arith.constant 0 : index
    %c0_28 = arith.constant 0 : index
    %41 = vector.load %arg7[%c0_27, %c0_28] : memref<32x64xbf16, #tpu.memory_space<vmem>>, vector<32x64xbf16>
    %cst_29 = arith.constant dense<0.000000e+00> : vector<4x64xf32>
    %42 = tpu.matmul %40, %41, %cst_29 {dimension_numbers = #tpu.dot_dimension_numbers<[1], [0], [0], [1], [0, 0, 1, 1], [], []>} : vector<4x32xbf16>, vector<32x64xbf16>, vector<4x64xf32> -> vector<4x64xf32>
    %43 = arith.truncf %42 : vector<4x64xf32> to vector<4x64xbf16>
    %c0_30 = arith.constant 0 : index
    %c0_31 = arith.constant 0 : index
    %c0_32 = arith.constant 0 : index
    %c0_33 = arith.constant 0 : index
    %44 = vector.load %arg8[%c0_30, %c0_31, %c0_32, %c0_33] : memref<1x4x4x64xbf16, #tpu.memory_space<vmem>>, vector<1x1x4x64xbf16>
    %45 = vector.shape_cast %44 : vector<1x1x4x64xbf16> to vector<4x64xbf16>
    %46 = vector.shape_cast %43 : vector<4x64xbf16> to vector<1x1x4x64xbf16>
    tpu.vector_store %arg8[%c0_30, %c0_31, %c0_32, %c0_33], %46 {strides = array<i32>} : memref<1x4x4x64xbf16, #tpu.memory_space<vmem>>, vector<1x1x4x64xbf16>,
    %cst_34 = arith.constant 0.000000e+00 : f32
    %47 = vector.broadcast %cst_34 : f32 to vector<4x32xf32>
    %c0_35 = arith.constant 0 : index
    %c1_36 = arith.constant 1 : index
    %c0_37 = arith.constant 0 : index
    %c0_38 = arith.constant 0 : index
    %c0_39 = arith.constant 0 : index
    %48 = vector.load %arg2[%c0_35, %c1_36, %c0_37, %c0_38, %c0_39] : memref<1x4x2x4x64xbf16, #tpu.memory_space<vmem>>, vector<1x1x1x4x64xbf16>
    %49 = vector.shape_cast %48 : vector<1x1x1x4x64xbf16> to vector<4x64xbf16>
    %c0_40 = arith.constant 0 : index
    %c0_41 = arith.constant 0 : index
    %c0_42 = arith.constant 0 : index
    %50 = vector.load %arg3[%c0_40, %c0_41, %c0_42] : memref<2x64x32xbf16, #tpu.memory_space<vmem>>, vector<1x64x32xbf16>
    %51 = vector.shape_cast %50 : vector<1x64x32xbf16> to vector<64x32xbf16>
    %cst_43 = arith.constant dense<0.000000e+00> : vector<4x32xf32>
    %52 = tpu.matmul %49, %51, %cst_43 {dimension_numbers = #tpu.dot_dimension_numbers<[1], [0], [0], [1], [0, 0, 1, 1], [], []>} : vector<4x64xbf16>, vector<64x32xbf16>, vector<4x32xf32> -> vector<4x32xf32>
    %53 = arith.addf %47, %52 : vector<4x32xf32>
    %c0_44 = arith.constant 0 : index
    %c1_45 = arith.constant 1 : index
    %c1_46 = arith.constant 1 : index
    %c0_47 = arith.constant 0 : index
    %c0_48 = arith.constant 0 : index
    %54 = vector.load %arg2[%c0_44, %c1_45, %c1_46, %c0_47, %c0_48] : memref<1x4x2x4x64xbf16, #tpu.memory_space<vmem>>, vector<1x1x1x4x64xbf16>
    %55 = vector.shape_cast %54 : vector<1x1x1x4x64xbf16> to vector<4x64xbf16>
    %c1_49 = arith.constant 1 : index
    %c0_50 = arith.constant 0 : index
    %c0_51 = arith.constant 0 : index
    %56 = vector.load %arg3[%c1_49, %c0_50, %c0_51] : memref<2x64x32xbf16, #tpu.memory_space<vmem>>, vector<1x64x32xbf16>
    %57 = vector.shape_cast %56 : vector<1x64x32xbf16> to vector<64x32xbf16>
    %cst_52 = arith.constant dense<0.000000e+00> : vector<4x32xf32>
    %58 = tpu.matmul %55, %57, %cst_52 {dimension_numbers = #tpu.dot_dimension_numbers<[1], [0], [0], [1], [0, 0, 1, 1], [], []>} : vector<4x64xbf16>, vector<64x32xbf16>, vector<4x32xf32> -> vector<4x32xf32>
    %59 = arith.addf %53, %58 : vector<4x32xf32>
    %c0_53 = arith.constant 0 : index
    %c0_54 = arith.constant 0 : index
    %60 = vector.load %arg4[%c0_53, %c0_54] : memref<1x32xf32, #tpu.memory_space<vmem>>, vector<1x32xf32>
    %61 = vector.broadcast %60 : vector<1x32xf32> to vector<4x32xf32>
    %62 = arith.addf %59, %61 : vector<4x32xf32>
    %cst_55 = arith.constant dense<0.000000e+00> : vector<4xf32>
    %63 = vector.multi_reduction <add>, %62, %cst_55 [1] : vector<4x32xf32> to vector<4xf32>
    %64 = vector.shape_cast %63 : vector<4xf32> to vector<4x1xf32>
    %cst_56 = arith.constant 3.200000e+01 : f32
    %65 = vector.broadcast %cst_56 : f32 to vector<4x1xf32>
    %66 = arith.divf %64, %65 : vector<4x1xf32>
    %67 = vector.broadcast %66 : vector<4x1xf32> to vector<4x32xf32>
    %68 = arith.subf %62, %67 : vector<4x32xf32>
    %69 = arith.mulf %68, %68 : vector<4x32xf32>
    %cst_57 = arith.constant dense<0.000000e+00> : vector<4xf32>
    %70 = vector.multi_reduction <add>, %69, %cst_57 [1] : vector<4x32xf32> to vector<4xf32>
    %71 = vector.shape_cast %70 : vector<4xf32> to vector<4x1xf32>
    %cst_58 = arith.constant 3.200000e+01 : f32
    %72 = vector.broadcast %cst_58 : f32 to vector<4x1xf32>
    %73 = arith.divf %71, %72 : vector<4x1xf32>
    %74 = vector.broadcast %66 : vector<4x1xf32> to vector<4x32xf32>
    %75 = arith.subf %62, %74 : vector<4x32xf32>
    %cst_59 = arith.constant 9.99999974E-6 : f32
    %76 = vector.broadcast %cst_59 : f32 to vector<4x1xf32>
    %77 = arith.addf %73, %76 : vector<4x1xf32>
    %78 = math.rsqrt %77 : vector<4x1xf32>
    %79 = vector.broadcast %78 : vector<4x1xf32> to vector<4x32xf32>
    %80 = arith.mulf %75, %79 : vector<4x32xf32>
    %c0_60 = arith.constant 0 : index
    %c0_61 = arith.constant 0 : index
    %81 = vector.load %arg5[%c0_60, %c0_61] : memref<1x32xf32, #tpu.memory_space<vmem>>, vector<1x32xf32>
    %82 = vector.broadcast %81 : vector<1x32xf32> to vector<4x32xf32>
    %83 = arith.mulf %80, %82 : vector<4x32xf32>
    %c0_62 = arith.constant 0 : index
    %c0_63 = arith.constant 0 : index
    %84 = vector.load %arg6[%c0_62, %c0_63] : memref<1x32xf32, #tpu.memory_space<vmem>>, vector<1x32xf32>
    %85 = vector.broadcast %84 : vector<1x32xf32> to vector<4x32xf32>
    %86 = arith.addf %83, %85 : vector<4x32xf32>
    %87 = arith.truncf %86 : vector<4x32xf32> to vector<4x32xbf16>
    %c0_64 = arith.constant 0 : index
    %c0_65 = arith.constant 0 : index
    %88 = vector.load %arg7[%c0_64, %c0_65] : memref<32x64xbf16, #tpu.memory_space<vmem>>, vector<32x64xbf16>
    %cst_66 = arith.constant dense<0.000000e+00> : vector<4x64xf32>
    %89 = tpu.matmul %87, %88, %cst_66 {dimension_numbers = #tpu.dot_dimension_numbers<[1], [0], [0], [1], [0, 0, 1, 1], [], []>} : vector<4x32xbf16>, vector<32x64xbf16>, vector<4x64xf32> -> vector<4x64xf32>
    %90 = arith.truncf %89 : vector<4x64xf32> to vector<4x64xbf16>
    %c0_67 = arith.constant 0 : index
    %c1_68 = arith.constant 1 : index
    %c0_69 = arith.constant 0 : index
    %c0_70 = arith.constant 0 : index
    %91 = vector.load %arg8[%c0_67, %c1_68, %c0_69, %c0_70] : memref<1x4x4x64xbf16, #tpu.memory_space<vmem>>, vector<1x1x4x64xbf16>
    %92 = vector.shape_cast %91 : vector<1x1x4x64xbf16> to vector<4x64xbf16>
    %93 = vector.shape_cast %90 : vector<4x64xbf16> to vector<1x1x4x64xbf16>
    tpu.vector_store %arg8[%c0_67, %c1_68, %c0_69, %c0_70], %93 {strides = array<i32>} : memref<1x4x4x64xbf16, #tpu.memory_space<vmem>>, vector<1x1x4x64xbf16>,
    %cst_71 = arith.constant 0.000000e+00 : f32
    %94 = vector.broadcast %cst_71 : f32 to vector<4x32xf32>
    %c0_72 = arith.constant 0 : index
    %c2 = arith.constant 2 : index
    %c0_73 = arith.constant 0 : index
    %c0_74 = arith.constant 0 : index
    %c0_75 = arith.constant 0 : index
    %95 = vector.load %arg2[%c0_72, %c2, %c0_73, %c0_74, %c0_75] : memref<1x4x2x4x64xbf16, #tpu.memory_space<vmem>>, vector<1x1x1x4x64xbf16>
    %96 = vector.shape_cast %95 : vector<1x1x1x4x64xbf16> to vector<4x64xbf16>
    %c0_76 = arith.constant 0 : index
    %c0_77 = arith.constant 0 : index
    %c0_78 = arith.constant 0 : index
    %97 = vector.load %arg3[%c0_76, %c0_77, %c0_78] : memref<2x64x32xbf16, #tpu.memory_space<vmem>>, vector<1x64x32xbf16>
    %98 = vector.shape_cast %97 : vector<1x64x32xbf16> to vector<64x32xbf16>
    %cst_79 = arith.constant dense<0.000000e+00> : vector<4x32xf32>
    %99 = tpu.matmul %96, %98, %cst_79 {dimension_numbers = #tpu.dot_dimension_numbers<[1], [0], [0], [1], [0, 0, 1, 1], [], []>} : vector<4x64xbf16>, vector<64x32xbf16>, vector<4x32xf32> -> vector<4x32xf32>
    %100 = arith.addf %94, %99 : vector<4x32xf32>
    %c0_80 = arith.constant 0 : index
    %c2_81 = arith.constant 2 : index
    %c1_82 = arith.constant 1 : index
    %c0_83 = arith.constant 0 : index
    %c0_84 = arith.constant 0 : index
    %101 = vector.load %arg2[%c0_80, %c2_81, %c1_82, %c0_83, %c0_84] : memref<1x4x2x4x64xbf16, #tpu.memory_space<vmem>>, vector<1x1x1x4x64xbf16>
    %102 = vector.shape_cast %101 : vector<1x1x1x4x64xbf16> to vector<4x64xbf16>
    %c1_85 = arith.constant 1 : index
    %c0_86 = arith.constant 0 : index
    %c0_87 = arith.constant 0 : index
    %103 = vector.load %arg3[%c1_85, %c0_86, %c0_87] : memref<2x64x32xbf16, #tpu.memory_space<vmem>>, vector<1x64x32xbf16>
    %104 = vector.shape_cast %103 : vector<1x64x32xbf16> to vector<64x32xbf16>
    %cst_88 = arith.constant dense<0.000000e+00> : vector<4x32xf32>
    %105 = tpu.matmul %102, %104, %cst_88 {dimension_numbers = #tpu.dot_dimension_numbers<[1], [0], [0], [1], [0, 0, 1, 1], [], []>} : vector<4x64xbf16>, vector<64x32xbf16>, vector<4x32xf32> -> vector<4x32xf32>
    %106 = arith.addf %100, %105 : vector<4x32xf32>
    %c0_89 = arith.constant 0 : index
    %c0_90 = arith.constant 0 : index
    %107 = vector.load %arg4[%c0_89, %c0_90] : memref<1x32xf32, #tpu.memory_space<vmem>>, vector<1x32xf32>
    %108 = vector.broadcast %107 : vector<1x32xf32> to vector<4x32xf32>
    %109 = arith.addf %106, %108 : vector<4x32xf32>
    %cst_91 = arith.constant dense<0.000000e+00> : vector<4xf32>
    %110 = vector.multi_reduction <add>, %109, %cst_91 [1] : vector<4x32xf32> to vector<4xf32>
    %111 = vector.shape_cast %110 : vector<4xf32> to vector<4x1xf32>
    %cst_92 = arith.constant 3.200000e+01 : f32
    %112 = vector.broadcast %cst_92 : f32 to vector<4x1xf32>
    %113 = arith.divf %111, %112 : vector<4x1xf32>
    %114 = vector.broadcast %113 : vector<4x1xf32> to vector<4x32xf32>
    %115 = arith.subf %109, %114 : vector<4x32xf32>
    %116 = arith.mulf %115, %115 : vector<4x32xf32>
    %cst_93 = arith.constant dense<0.000000e+00> : vector<4xf32>
    %117 = vector.multi_reduction <add>, %116, %cst_93 [1] : vector<4x32xf32> to vector<4xf32>
    %118 = vector.shape_cast %117 : vector<4xf32> to vector<4x1xf32>
    %cst_94 = arith.constant 3.200000e+01 : f32
    %119 = vector.broadcast %cst_94 : f32 to vector<4x1xf32>
    %120 = arith.divf %118, %119 : vector<4x1xf32>
    %121 = vector.broadcast %113 : vector<4x1xf32> to vector<4x32xf32>
    %122 = arith.subf %109, %121 : vector<4x32xf32>
    %cst_95 = arith.constant 9.99999974E-6 : f32
    %123 = vector.broadcast %cst_95 : f32 to vector<4x1xf32>
    %124 = arith.addf %120, %123 : vector<4x1xf32>
    %125 = math.rsqrt %124 : vector<4x1xf32>
    %126 = vector.broadcast %125 : vector<4x1xf32> to vector<4x32xf32>
    %127 = arith.mulf %122, %126 : vector<4x32xf32>
    %c0_96 = arith.constant 0 : index
    %c0_97 = arith.constant 0 : index
    %128 = vector.load %arg5[%c0_96, %c0_97] : memref<1x32xf32, #tpu.memory_space<vmem>>, vector<1x32xf32>
    %129 = vector.broadcast %128 : vector<1x32xf32> to vector<4x32xf32>
    %130 = arith.mulf %127, %129 : vector<4x32xf32>
    %c0_98 = arith.constant 0 : index
    %c0_99 = arith.constant 0 : index
    %131 = vector.load %arg6[%c0_98, %c0_99] : memref<1x32xf32, #tpu.memory_space<vmem>>, vector<1x32xf32>
    %132 = vector.broadcast %131 : vector<1x32xf32> to vector<4x32xf32>
    %133 = arith.addf %130, %132 : vector<4x32xf32>
    %134 = arith.truncf %133 : vector<4x32xf32> to vector<4x32xbf16>
    %c0_100 = arith.constant 0 : index
    %c0_101 = arith.constant 0 : index
    %135 = vector.load %arg7[%c0_100, %c0_101] : memref<32x64xbf16, #tpu.memory_space<vmem>>, vector<32x64xbf16>
    %cst_102 = arith.constant dense<0.000000e+00> : vector<4x64xf32>
    %136 = tpu.matmul %134, %135, %cst_102 {dimension_numbers = #tpu.dot_dimension_numbers<[1], [0], [0], [1], [0, 0, 1, 1], [], []>} : vector<4x32xbf16>, vector<32x64xbf16>, vector<4x64xf32> -> vector<4x64xf32>
    %137 = arith.truncf %136 : vector<4x64xf32> to vector<4x64xbf16>
    %c0_103 = arith.constant 0 : index
    %c2_104 = arith.constant 2 : index
    %c0_105 = arith.constant 0 : index
    %c0_106 = arith.constant 0 : index
    %138 = vector.load %arg8[%c0_103, %c2_104, %c0_105, %c0_106] : memref<1x4x4x64xbf16, #tpu.memory_space<vmem>>, vector<1x1x4x64xbf16>
    %139 = vector.shape_cast %138 : vector<1x1x4x64xbf16> to vector<4x64xbf16>
    %140 = vector.shape_cast %137 : vector<4x64xbf16> to vector<1x1x4x64xbf16>
    tpu.vector_store %arg8[%c0_103, %c2_104, %c0_105, %c0_106], %140 {strides = array<i32>} : memref<1x4x4x64xbf16, #tpu.memory_space<vmem>>, vector<1x1x4x64xbf16>,
    %cst_107 = arith.constant 0.000000e+00 : f32
    %141 = vector.broadcast %cst_107 : f32 to vector<4x32xf32>
    %c0_108 = arith.constant 0 : index
    %c3 = arith.constant 3 : index
    %c0_109 = arith.constant 0 : index
    %c0_110 = arith.constant 0 : index
    %c0_111 = arith.constant 0 : index
    %142 = vector.load %arg2[%c0_108, %c3, %c0_109, %c0_110, %c0_111] : memref<1x4x2x4x64xbf16, #tpu.memory_space<vmem>>, vector<1x1x1x4x64xbf16>
    %143 = vector.shape_cast %142 : vector<1x1x1x4x64xbf16> to vector<4x64xbf16>
    %c0_112 = arith.constant 0 : index
    %c0_113 = arith.constant 0 : index
    %c0_114 = arith.constant 0 : index
    %144 = vector.load %arg3[%c0_112, %c0_113, %c0_114] : memref<2x64x32xbf16, #tpu.memory_space<vmem>>, vector<1x64x32xbf16>
    %145 = vector.shape_cast %144 : vector<1x64x32xbf16> to vector<64x32xbf16>
    %cst_115 = arith.constant dense<0.000000e+00> : vector<4x32xf32>
    %146 = tpu.matmul %143, %145, %cst_115 {dimension_numbers = #tpu.dot_dimension_numbers<[1], [0], [0], [1], [0, 0, 1, 1], [], []>} : vector<4x64xbf16>, vector<64x32xbf16>, vector<4x32xf32> -> vector<4x32xf32>
    %147 = arith.addf %141, %146 : vector<4x32xf32>
    %c0_116 = arith.constant 0 : index
    %c3_117 = arith.constant 3 : index
    %c1_118 = arith.constant 1 : index
    %c0_119 = arith.constant 0 : index
    %c0_120 = arith.constant 0 : index
    %148 = vector.load %arg2[%c0_116, %c3_117, %c1_118, %c0_119, %c0_120] : memref<1x4x2x4x64xbf16, #tpu.memory_space<vmem>>, vector<1x1x1x4x64xbf16>
    %149 = vector.shape_cast %148 : vector<1x1x1x4x64xbf16> to vector<4x64xbf16>
    %c1_121 = arith.constant 1 : index
    %c0_122 = arith.constant 0 : index
    %c0_123 = arith.constant 0 : index
    %150 = vector.load %arg3[%c1_121, %c0_122, %c0_123] : memref<2x64x32xbf16, #tpu.memory_space<vmem>>, vector<1x64x32xbf16>
    %151 = vector.shape_cast %150 : vector<1x64x32xbf16> to vector<64x32xbf16>
    %cst_124 = arith.constant dense<0.000000e+00> : vector<4x32xf32>
    %152 = tpu.matmul %149, %151, %cst_124 {dimension_numbers = #tpu.dot_dimension_numbers<[1], [0], [0], [1], [0, 0, 1, 1], [], []>} : vector<4x64xbf16>, vector<64x32xbf16>, vector<4x32xf32> -> vector<4x32xf32>
    %153 = arith.addf %147, %152 : vector<4x32xf32>
    %c0_125 = arith.constant 0 : index
    %c0_126 = arith.constant 0 : index
    %154 = vector.load %arg4[%c0_125, %c0_126] : memref<1x32xf32, #tpu.memory_space<vmem>>, vector<1x32xf32>
    %155 = vector.broadcast %154 : vector<1x32xf32> to vector<4x32xf32>
    %156 = arith.addf %153, %155 : vector<4x32xf32>
    %cst_127 = arith.constant dense<0.000000e+00> : vector<4xf32>
    %157 = vector.multi_reduction <add>, %156, %cst_127 [1] : vector<4x32xf32> to vector<4xf32>
    %158 = vector.shape_cast %157 : vector<4xf32> to vector<4x1xf32>
    %cst_128 = arith.constant 3.200000e+01 : f32
    %159 = vector.broadcast %cst_128 : f32 to vector<4x1xf32>
    %160 = arith.divf %158, %159 : vector<4x1xf32>
    %161 = vector.broadcast %160 : vector<4x1xf32> to vector<4x32xf32>
    %162 = arith.subf %156, %161 : vector<4x32xf32>
    %163 = arith.mulf %162, %162 : vector<4x32xf32>
    %cst_129 = arith.constant dense<0.000000e+00> : vector<4xf32>
    %164 = vector.multi_reduction <add>, %163, %cst_129 [1] : vector<4x32xf32> to vector<4xf32>
    %165 = vector.shape_cast %164 : vector<4xf32> to vector<4x1xf32>
    %cst_130 = arith.constant 3.200000e+01 : f32
    %166 = vector.broadcast %cst_130 : f32 to vector<4x1xf32>
    %167 = arith.divf %165, %166 : vector<4x1xf32>
    %168 = vector.broadcast %160 : vector<4x1xf32> to vector<4x32xf32>
    %169 = arith.subf %156, %168 : vector<4x32xf32>
    %cst_131 = arith.constant 9.99999974E-6 : f32
    %170 = vector.broadcast %cst_131 : f32 to vector<4x1xf32>
    %171 = arith.addf %167, %170 : vector<4x1xf32>
    %172 = math.rsqrt %171 : vector<4x1xf32>
    %173 = vector.broadcast %172 : vector<4x1xf32> to vector<4x32xf32>
    %174 = arith.mulf %169, %173 : vector<4x32xf32>
    %c0_132 = arith.constant 0 : index
    %c0_133 = arith.constant 0 : index
    %175 = vector.load %arg5[%c0_132, %c0_133] : memref<1x32xf32, #tpu.memory_space<vmem>>, vector<1x32xf32>
    %176 = vector.broadcast %175 : vector<1x32xf32> to vector<4x32xf32>
    %177 = arith.mulf %174, %176 : vector<4x32xf32>
    %c0_134 = arith.constant 0 : index
    %c0_135 = arith.constant 0 : index
    %178 = vector.load %arg6[%c0_134, %c0_135] : memref<1x32xf32, #tpu.memory_space<vmem>>, vector<1x32xf32>
    %179 = vector.broadcast %178 : vector<1x32xf32> to vector<4x32xf32>
    %180 = arith.addf %177, %179 : vector<4x32xf32>
    %181 = arith.truncf %180 : vector<4x32xf32> to vector<4x32xbf16>
    %c0_136 = arith.constant 0 : index
    %c0_137 = arith.constant 0 : index
    %182 = vector.load %arg7[%c0_136, %c0_137] : memref<32x64xbf16, #tpu.memory_space<vmem>>, vector<32x64xbf16>
    %cst_138 = arith.constant dense<0.000000e+00> : vector<4x64xf32>
    %183 = tpu.matmul %181, %182, %cst_138 {dimension_numbers = #tpu.dot_dimension_numbers<[1], [0], [0], [1], [0, 0, 1, 1], [], []>} : vector<4x32xbf16>, vector<32x64xbf16>, vector<4x64xf32> -> vector<4x64xf32>
    %184 = arith.truncf %183 : vector<4x64xf32> to vector<4x64xbf16>
    %c0_139 = arith.constant 0 : index
    %c3_140 = arith.constant 3 : index
    %c0_141 = arith.constant 0 : index
    %c0_142 = arith.constant 0 : index
    %185 = vector.load %arg8[%c0_139, %c3_140, %c0_141, %c0_142] : memref<1x4x4x64xbf16, #tpu.memory_space<vmem>>, vector<1x1x4x64xbf16>
    %186 = vector.shape_cast %185 : vector<1x1x4x64xbf16> to vector<4x64xbf16>
    %187 = vector.shape_cast %184 : vector<4x64xbf16> to vector<1x1x4x64xbf16>
    tpu.vector_store %arg8[%c0_139, %c3_140, %c0_141, %c0_142], %187 {strides = array<i32>} : memref<1x4x4x64xbf16, #tpu.memory_space<vmem>>, vector<1x1x4x64xbf16>,
    return
  }
  func.func @transform_0(%arg0: i32, %arg1: i32) -> (i32, i32, i32, i32, i32) {
    %c0_i32 = arith.constant 0 : i32
    %c0_i32_0 = arith.constant 0 : i32
    %c0_i32_1 = arith.constant 0 : i32
    %c0_i32_2 = arith.constant 0 : i32
    return %arg0, %arg1, %c0_i32, %c0_i32_0, %c0_i32_1 : i32, i32, i32, i32, i32
  }
  func.func @transform_1(%arg0: i32, %arg1: i32) -> (i32, i32, i32) {
    %c0_i32 = arith.constant 0 : i32
    %c0_i32_0 = arith.constant 0 : i32
    %c0_i32_1 = arith.constant 0 : i32
    %c0_i32_2 = arith.constant 0 : i32
    return %c0_i32, %c0_i32_0, %c0_i32_1 : i32, i32, i32
  }
  func.func @transform_2(%arg0: i32, %arg1: i32) -> (i32, i32) {
    %c0_i32 = arith.constant 0 : i32
    %c0_i32_0 = arith.constant 0 : i32
    %c0_i32_1 = arith.constant 0 : i32
    return %c0_i32, %c0_i32_0 : i32, i32
  }
  func.func @transform_3(%arg0: i32, %arg1: i32) -> (i32, i32) {
    %c0_i32 = arith.constant 0 : i32
    %c0_i32_0 = arith.constant 0 : i32
    %c0_i32_1 = arith.constant 0 : i32
    return %c0_i32, %c0_i32_0 : i32, i32
  }
  func.func @transform_4(%arg0: i32, %arg1: i32) -> (i32, i32) {
    %c0_i32 = arith.constant 0 : i32
    %c0_i32_0 = arith.constant 0 : i32
    %c0_i32_1 = arith.constant 0 : i32
    return %c0_i32, %c0_i32_0 : i32, i32
  }
  func.func @transform_5(%arg0: i32, %arg1: i32) -> (i32, i32) {
    %c0_i32 = arith.constant 0 : i32
    %c0_i32_0 = arith.constant 0 : i32
    %c0_i32_1 = arith.constant 0 : i32
    return %c0_i32, %c0_i32_0 : i32, i32
  }
  func.func @transform_6(%arg0: i32, %arg1: i32) -> (i32, i32, i32, i32) {
    %c0_i32 = arith.constant 0 : i32
    %c0_i32_0 = arith.constant 0 : i32
    %c0_i32_1 = arith.constant 0 : i32
    return %arg0, %arg1, %c0_i32, %c0_i32_0 : i32, i32, i32, i32
  }
}

</mosaic_0001>

<llo_original>
// kernel: tpu_custom_call.1
$region0: #{tpu_custom_call.1}
  #allocation0 [shape = 'u32[]', space=smem, size = 0x4, offset = 0x4, fixed_abs, tag = 'smem constant byte address 0x4 - core index']
  #allocation1 [shape = 'u32[72,128]{1,0:T(1,128)}', space=vmem, size = 0x9000, scoped, tag = 'internal scratch']
  %s0 = inlined_call_operand.vmem [shape: bf16[2,4,2,4,64], index: 0, kind: input, shape index: {}]
  %s1 = inlined_call_operand.vmem [shape: bf16[2,64,32], index: 1, kind: input, shape index: {}]
  %s2 = inlined_call_operand.vmem [shape: f32[1,32], index: 2, kind: input, shape index: {}]
  %s3 = inlined_call_operand.vmem [shape: f32[1,32], index: 3, kind: input, shape index: {}]
  %s4 = inlined_call_operand.vmem [shape: f32[1,32], index: 4, kind: input, shape index: {}]
  %s5 = inlined_call_operand.vmem [shape: bf16[32,64], index: 5, kind: input, shape index: {}]
  %s6 = inlined_call_operand.hbm [shape: bf16[2,4,4,64], index: 6, kind: output, shape index: {}]
  %s7 = sld [smem:[#allocation0]]
  $region57: #{tpu_custom_call.1} parent=0
    _
  %s9 = ssub.s32 1, %s7
  %s10 = scalar_select 0, %s9, %s7
  $region1: #{tpu_custom_call.1} parent=0
    #allocation2 [shape = 'u8[8192]{0}', space=vmem, size = 0x2000, scoped, tag = 'output window, operand 0']
    #allocation3 [shape = 's32[2]{0}', space=sflag, size = 0x8, scoped, tag = 'scoped memory for tpu_custom_call.1']
    %11 = vsyncpa [#allocation3], 0
    %s12 = scalar_lea.sflag [#allocation3], 1
    %13 = vsyncpa %s12, 0
    loop: start=0, step=1, limit=4
    $region2: #{tpu_custom_call.1} parent=1 // loop_pre_header
      _
    $region3: #{tpu_custom_call.1} parent=1 // loop_header
      %s15 = sphi 0, %s19
      %p16 = scmp.ge.s32.totalorder %s15, 4
      %s22 = sphi 0, %s34
      %s23 = sphi 0, %s30
      %s24 = sphi 0, %s22
      %s25 = sphi 0, %s23
      %s26 = sphi 0, %s24
      %s27 = sphi 0, %s25
      %s39 = sphi 0, %s41
      %s42 = sphi 0, %s39
      %s43 = sphi 0, %s42
      %s59 = sphi 0, %s43
      %s63 = sphi 0, %s63
      %s65 = sphi 0, %s63
      %s66 = sphi 0, %s65
      %s80 = sphi 0, %s66
      %s84 = sphi 0, %s84
      %s86 = sphi 0, %s84
      %s87 = sphi 0, %s86
      %s101 = sphi 0, %s87
      %s105 = sphi 0, %s105
      %s107 = sphi 0, %s105
      %s108 = sphi 0, %s107
      %s122 = sphi 0, %s108
      %s126 = sphi 0, %s126
      %s128 = sphi 0, %s126
      %s129 = sphi 0, %s128
      %s143 = sphi 0, %s129
      %s147 = sphi 0, %s147
      %s149 = sphi 0, %s147
      %s150 = sphi 0, %s149
      %s164 = sphi 0, %s150
      %s172 = sphi 0, %s174
      %s175 = sphi 0, %s172
      %s176 = sphi 0, %s175
      %s192 = sphi 0, %s176
    $region4: #{tpu_custom_call.1} parent=1 // loop_header_branch
      %18 = sbr.rel (%p16) target = $region8
    $region5: #{tpu_custom_call.1} parent=1 // loop_body
      %s20 = ssub.s32 %s15, 1
      %s21 = ssub.s32 %s15, 2
      %s28 = sadd.s32 1, %s23
      %p29 = scmp.ge.s32.totalorder %s28, 1
      %s30 = scalar_select %p29, 0, %s28
      %s31 = sadd.s32 1, %s22
      %s32 = scalar_select %p29, %s31, %s22
      %p33 = scmp.ge.s32.totalorder %s32, 2
      %s34 = scalar_select %p33, 0, %s32
      %s35 = ssub.s32 %s22, %s34
      %s36 = ssub.s32 %s23, %s30
      %s37 = sor.u32 %s35, %s36
      %p38 = scmp.eq.s32.totalorder %s37, 0
      %s40 = sadd.s32 %s39, 1
      %s41 = scalar_select %p38, %s39, %s40
      %p44 = pneg %p38
      %p45 = scmp.eq.s32.totalorder %s15, 1
      %p46 = por %p44, %p45
      %p47 = scmp.ne.s32.totalorder %s39, %s42
      %p48 = scmp.eq.s32.totalorder %s15, 0
      %p49 = por %p47, %p48
      %p50 = scmp.ne.s32.totalorder %s39, %s42
      %p51 = scmp.eq.s32.totalorder %s20, 1
      %p52 = por %p50, %p51
      %p53 = scmp.ne.s32.totalorder %s42, %s43
      %p54 = scmp.eq.s32.totalorder %s20, 0
      %p55 = por %p53, %p54
      %p56 = scmp.ne.s32.totalorder %s42, %s43
      %p57 = scmp.eq.s32.totalorder %s21, 1
      %p58 = por %p56, %p57
      %p60 = scmp.ne.s32.totalorder %s43, %s59
      %p61 = scmp.eq.s32.totalorder %s21, 0
      %p62 = por %p60, %p61
      %s64 = sadd.s32 %s63, 1
      %p67 = scmp.eq.s32.totalorder %s15, 1
      %p68 = scmp.ne.s32.totalorder %s63, %s65
      %p69 = scmp.eq.s32.totalorder %s15, 0
      %p70 = por %p68, %p69
      %p71 = scmp.ne.s32.totalorder %s63, %s65
      %p72 = scmp.eq.s32.totalorder %s20, 1
      %p73 = por %p71, %p72
      %p74 = scmp.ne.s32.totalorder %s65, %s66
      %p75 = scmp.eq.s32.totalorder %s20, 0
      %p76 = por %p74, %p75
      %p77 = scmp.ne.s32.totalorder %s65, %s66
      %p78 = scmp.eq.s32.totalorder %s21, 1
      %p79 = por %p77, %p78
      %p81 = scmp.ne.s32.totalorder %s66, %s80
      %p82 = scmp.eq.s32.totalorder %s21, 0
      %p83 = por %p81, %p82
      %s85 = sadd.s32 %s84, 1
      %p88 = scmp.eq.s32.totalorder %s15, 1
      %p89 = scmp.ne.s32.totalorder %s84, %s86
      %p90 = scmp.eq.s32.totalorder %s15, 0
      %p91 = por %p89, %p90
      %p92 = scmp.ne.s32.totalorder %s84, %s86
      %p93 = scmp.eq.s32.totalorder %s20, 1
      %p94 = por %p92, %p93
      %p95 = scmp.ne.s32.totalorder %s86, %s87
      %p96 = scmp.eq.s32.totalorder %s20, 0
      %p97 = por %p95, %p96
      %p98 = scmp.ne.s32.totalorder %s86, %s87
      %p99 = scmp.eq.s32.totalorder %s21, 1
      %p100 = por %p98, %p99
      %p102 = scmp.ne.s32.totalorder %s87, %s101
      %p103 = scmp.eq.s32.totalorder %s21, 0
      %p104 = por %p102, %p103
      %s106 = sadd.s32 %s105, 1
      %p109 = scmp.eq.s32.totalorder %s15, 1
      %p110 = scmp.ne.s32.totalorder %s105, %s107
      %p111 = scmp.eq.s32.totalorder %s15, 0
      %p112 = por %p110, %p111
      %p113 = scmp.ne.s32.totalorder %s105, %s107
      %p114 = scmp.eq.s32.totalorder %s20, 1
      %p115 = por %p113, %p114
      %p116 = scmp.ne.s32.totalorder %s107, %s108
      %p117 = scmp.eq.s32.totalorder %s20, 0
      %p118 = por %p116, %p117
      %p119 = scmp.ne.s32.totalorder %s107, %s108
      %p120 = scmp.eq.s32.totalorder %s21, 1
      %p121 = por %p119, %p120
      %p123 = scmp.ne.s32.totalorder %s108, %s122
      %p124 = scmp.eq.s32.totalorder %s21, 0
      %p125 = por %p123, %p124
      %s127 = sadd.s32 %s126, 1
      %p130 = scmp.eq.s32.totalorder %s15, 1
      %p131 = scmp.ne.s32.totalorder %s126, %s128
      %p132 = scmp.eq.s32.totalorder %s15, 0
      %p133 = por %p131, %p132
      %p134 = scmp.ne.s32.totalorder %s126, %s128
      %p135 = scmp.eq.s32.totalorder %s20, 1
      %p136 = por %p134, %p135
      %p137 = scmp.ne.s32.totalorder %s128, %s129
      %p138 = scmp.eq.s32.totalorder %s20, 0
      %p139 = por %p137, %p138
      %p140 = scmp.ne.s32.totalorder %s128, %s129
      %p141 = scmp.eq.s32.totalorder %s21, 1
      %p142 = por %p140, %p141
      %p144 = scmp.ne.s32.totalorder %s129, %s143
      %p145 = scmp.eq.s32.totalorder %s21, 0
      %p146 = por %p144, %p145
      %s148 = sadd.s32 %s147, 1
      %p151 = scmp.eq.s32.totalorder %s15, 1
      %p152 = scmp.ne.s32.totalorder %s147, %s149
      %p153 = scmp.eq.s32.totalorder %s15, 0
      %p154 = por %p152, %p153
      %p155 = scmp.ne.s32.totalorder %s147, %s149
      %p156 = scmp.eq.s32.totalorder %s20, 1
      %p157 = por %p155, %p156
      %p158 = scmp.ne.s32.totalorder %s149, %s150
      %p159 = scmp.eq.s32.totalorder %s20, 0
      %p160 = por %p158, %p159
      %p161 = scmp.ne.s32.totalorder %s149, %s150
      %p162 = scmp.eq.s32.totalorder %s21, 1
      %p163 = por %p161, %p162
      %p165 = scmp.ne.s32.totalorder %s150, %s164
      %p166 = scmp.eq.s32.totalorder %s21, 0
      %p167 = por %p165, %p166
      %s168 = ssub.s32 %s22, %s34
      %s169 = ssub.s32 %s23, %s30
      %s170 = sor.u32 %s168, %s169
      %p171 = scmp.eq.s32.totalorder %s170, 0
      %s173 = sadd.s32 %s172, 1
      %s174 = scalar_select %p171, %s172, %s173
      %p177 = pneg %p171
      %p178 = scmp.eq.s32.totalorder %s15, 1
      %p179 = por %p177, %p178
      %p180 = scmp.ne.s32.totalorder %s172, %s175
      %p181 = scmp.eq.s32.totalorder %s15, 0
      %p182 = por %p180, %p181
      %p183 = scmp.ne.s32.totalorder %s172, %s175
      %p184 = scmp.eq.s32.totalorder %s20, 1
      %p185 = por %p183, %p184
      %p186 = scmp.ne.s32.totalorder %s175, %s176
      %p187 = scmp.eq.s32.totalorder %s20, 0
      %p188 = por %p186, %p187
      %p189 = scmp.ne.s32.totalorder %s175, %s176
      %p190 = scmp.eq.s32.totalorder %s21, 1
      %p191 = por %p189, %p190
      %p193 = scmp.ne.s32.totalorder %s176, %s192
      %p194 = scmp.eq.s32.totalorder %s21, 0
      %p195 = por %p193, %p194
      %p196 = scmp.le.s32.totalorder 1, %s15
      %p197 = scmp.lt.s32.totalorder %s15, 3
      %p198 = pnand %p196, %p197
      %p199 = pneg %p198
      // Predicated region
      $region9: #{tpu_custom_call.1} parent=5 // pred_check
        _
      $region10: #{tpu_custom_call.1} parent=5 // pred_check_branch
        %201 = sbr.rel (%p198) target = $region12
      $region11: #{tpu_custom_call.1} parent=5 // pred_region
        %s202 = ssub.s32 %s15, 1
        // Predicated region
        $region13: #{tpu_custom_call.1} parent=11 // pred_check
          %p203 = pneg %p76
        $region14: #{tpu_custom_call.1} parent=11 // pred_check_branch
          %205 = sbr.rel (%p203) target = $region16
        $region15: #{tpu_custom_call.1} parent=11 // pred_region
          _
        $region16: #{tpu_custom_call.1} parent=11 // pred_fallthru
          _
        // Predicated region
        $region17: #{tpu_custom_call.1} parent=11 // pred_check
          %p206 = pneg %p97
        $region18: #{tpu_custom_call.1} parent=11 // pred_check_branch
          %208 = sbr.rel (%p206) target = $region20
        $region19: #{tpu_custom_call.1} parent=11 // pred_region
          _
        $region20: #{tpu_custom_call.1} parent=11 // pred_fallthru
          _
        // Predicated region
        $region21: #{tpu_custom_call.1} parent=11 // pred_check
          %p209 = pneg %p118
        $region22: #{tpu_custom_call.1} parent=11 // pred_check_branch
          %211 = sbr.rel (%p209) target = $region24
        $region23: #{tpu_custom_call.1} parent=11 // pred_region
          _
        $region24: #{tpu_custom_call.1} parent=11 // pred_fallthru
          _
        // Predicated region
        $region25: #{tpu_custom_call.1} parent=11 // pred_check
          %p212 = pneg %p139
        $region26: #{tpu_custom_call.1} parent=11 // pred_check_branch
          %214 = sbr.rel (%p212) target = $region28
        $region27: #{tpu_custom_call.1} parent=11 // pred_region
          _
        $region28: #{tpu_custom_call.1} parent=11 // pred_fallthru
          _
        // Predicated region
        $region29: #{tpu_custom_call.1} parent=11 // pred_check
          %p215 = pneg %p160
        $region30: #{tpu_custom_call.1} parent=11 // pred_check_branch
          %217 = sbr.rel (%p215) target = $region32
        $region31: #{tpu_custom_call.1} parent=11 // pred_region
          _
        $region32: #{tpu_custom_call.1} parent=11 // pred_fallthru
          _
      $region12: #{tpu_custom_call.1} parent=5 // pred_fallthru
        _
      %p218 = scmp.lt.s32.totalorder %s15, 2
      // Predicated region
      $region33: #{tpu_custom_call.1} parent=5 // pred_check
        %p219 = pneg %p218
      $region34: #{tpu_custom_call.1} parent=5 // pred_check_branch
        %221 = sbr.rel (%p219) target = $region36
      $region35: #{tpu_custom_call.1} parent=5 // pred_region
        // Predicated region
        $region37: #{tpu_custom_call.1} parent=35 // pred_check
          %p222 = pneg %p49
        $region38: #{tpu_custom_call.1} parent=35 // pred_check_branch
          %224 = sbr.rel (%p222) target = $region40
        $region39: #{tpu_custom_call.1} parent=35 // pred_region
          %s225 = smul.u32 4, %s23
          %p226 = scmp.lt.s32.totalorder %s22, 1
          %s227 = scalar_select %p226, %s22, 1
          %p228 = scmp.lt.s32.totalorder %s225, 3
          %s229 = scalar_select %p228, %s225, 3
          %s230 = smul.addr %s229, 2
          %s231 = smul.addr %s227, 8
          %s232 = sadd.s32 %s230, %s231
          %s233 = smul.addr %s232, 2
          %s234 = scalar_lea.vmem %s0, %s233
          %s235 = smul.u32 4, %s23
        $region40: #{tpu_custom_call.1} parent=35 // pred_fallthru
          _
      $region36: #{tpu_custom_call.1} parent=5 // pred_fallthru
        _
      %p236 = scmp.le.s32.totalorder 1, %s15
      %p237 = scmp.lt.s32.totalorder %s15, 3
      %p238 = pnand %p236, %p237
      %p239 = pneg %p238
      // Predicated region
      $region41: #{tpu_custom_call.1} parent=5 // pred_check
        _
      $region42: #{tpu_custom_call.1} parent=5 // pred_check_branch
        %241 = sbr.rel (%p238) target = $region44
      $region43: #{tpu_custom_call.1} parent=5 // pred_region
        %s242 = ssub.s32 %s15, 1
        %s243 = smul.u32 4, %s25
        %p244 = scmp.lt.s32.totalorder %s24, 1
        %s245 = scalar_select %p244, %s24, 1
        %p246 = scmp.lt.s32.totalorder %s243, 3
        %s247 = scalar_select %p246, %s243, 3
        %s248 = smul.addr %s247, 2
        %s249 = smul.addr %s245, 8
        %s250 = sadd.s32 %s248, %s249
        %s251 = smul.addr %s250, 2
        %s252 = scalar_lea.vmem %s0, %s251
        %p253 = pneg %p55
        %p254 = pneg %p52
        %p255 = pneg %p76
        %p256 = pneg %p73
        %p257 = pneg %p97
        %p258 = pneg %p94
        %p259 = pneg %p118
        %p260 = pneg %p115
        %p261 = pneg %p139
        %p262 = pneg %p136
        %p263 = pneg %p160
        %p264 = pneg %p157
        %p265 = pneg %p188
        %p266 = pneg %p185
        %s267 = sand.u32 %s175, 1
        %s268 = scalar_lea.sflag [#allocation3], %s267
        %s269 = sand.u32 %s175, 1
        %s270 = smul.addr %s269, 8
        %s271 = scalar_lea.vmem [#allocation2], %s270
        %s272 = smul.u32 4, %s25
        %p273 = scmp.lt.s32.totalorder %s24, 1
        %s274 = scalar_select %p273, %s24, 1
        %p275 = scmp.lt.s32.totalorder %s272, 3
        %s276 = scalar_select %p275, %s272, 3
        %s277 = smul.addr %s276, 2
        %s278 = smul.addr %s274, 8
        %s279 = sadd.s32 %s277, %s278
        %s280 = smul.addr %s279, 2
        %s281 = scalar_lea.vmem %s0, %s280
        %s282 = smul.u32 4, %s25
        %s283 = smul.u32 4, %s25
        %v285 = vld [vmem:[%s281] sm:$0x3]
        %v286 = vld [vmem:[%s1] sm:$0xf]
        %v287 = vld [vmem:[%s1 + $0x4] sm:$0xf]
        %v288 = vld [vmem:[%s1 + $0x8] sm:$0xf]
        %v289 = vld [vmem:[%s1 + $0xc] sm:$0xf]
        %v290 = vld [vmem:[%s1 + $0x10] sm:$0xf]
        %v291 = vld [vmem:[%s1 + $0x14] sm:$0xf]
        %v292 = vld [vmem:[%s1 + $0x18] sm:$0xf]
        %v293 = vld [vmem:[%s1 + $0x1c] sm:$0xf]
        %s294 = scalar_lea.vmem %s281, 2
        %v295 = vld [vmem:[%s294] sm:$0x3]
        %s296 = scalar_lea.vmem %s1, 32
        %v297 = vld [vmem:[%s296] sm:$0xf]
        %v298 = vld [vmem:[%s296 + $0x4] sm:$0xf]
        %v299 = vld [vmem:[%s296 + $0x8] sm:$0xf]
        %v300 = vld [vmem:[%s296 + $0xc] sm:$0xf]
        %v301 = vld [vmem:[%s296 + $0x10] sm:$0xf]
        %v302 = vld [vmem:[%s296 + $0x14] sm:$0xf]
        %v303 = vld [vmem:[%s296 + $0x18] sm:$0xf]
        %v304 = vld [vmem:[%s296 + $0x1c] sm:$0xf]
        %v313 = vunpack.c.l.b16 %v297
        %v314 = vunpack.c.l.b16 %v298
        %v315 = vunpack.c.l.b16 %v299
        %v316 = vunpack.c.l.b16 %v300
        %v317 = vunpack.c.l.b16 %v301
        %v318 = vunpack.c.l.b16 %v302
        %v319 = vunpack.c.l.b16 %v303
        %v320 = vunpack.c.l.b16 %v304
        %v321 = vpack.c.b16 %v314, %v313
        %v322 = vpack.c.b16 %v316, %v315
        %v323 = vpack.c.b16 %v318, %v317
        %v324 = vpack.c.b16 %v320, %v319
        %vm329 = vcmask 523264
        %v331 = vsel %vm329, %v295, 0
        %333 = vmatpush.bf16.msra.mxu0 0
        %334 = vmatpush.bf16.msra.mxu0 0
        %335 = vmatpush.bf16.msra.mxu0 0
        %336 = vmatpush.bf16.msra.mxu0 0
        %337 = vmatpush.bf16.msra.mxu0 %v324
        %338 = vmatpush.bf16.msra.mxu0 %v323
        %339 = vmatpush.bf16.msra.mxu0 %v322
        %340 = vmatpush.bf16.msra.mxu0 %v321
        %341 = vmatmul.bf16.gmra.mxu0 %v331
        %v342 = vpop.f32.mrf.mxu0
        %v343 = vadd.f32 0.0, %v342
        %v344 = vpop.f32.mrf.mxu0
        %345 = vdwg.mxu0
        %v354 = vunpack.c.l.b16 %v286
        %v355 = vunpack.c.l.b16 %v287
        %v356 = vunpack.c.l.b16 %v288
        %v357 = vunpack.c.l.b16 %v289
        %v358 = vunpack.c.l.b16 %v290
        %v359 = vunpack.c.l.b16 %v291
        %v360 = vunpack.c.l.b16 %v292
        %v361 = vunpack.c.l.b16 %v293
        %v362 = vpack.c.b16 %v355, %v354
        %v363 = vpack.c.b16 %v357, %v356
        %v364 = vpack.c.b16 %v359, %v358
        %v365 = vpack.c.b16 %v361, %v360
        %v371 = vsel %vm329, %v285, 0
        %373 = vmatpush.bf16.msra.mxu0 0
        %374 = vmatpush.bf16.msra.mxu0 0
        %375 = vmatpush.bf16.msra.mxu0 0
        %376 = vmatpush.bf16.msra.mxu0 0
        %377 = vmatpush.bf16.msra.mxu0 %v365
        %378 = vmatpush.bf16.msra.mxu0 %v364
        %379 = vmatpush.bf16.msra.mxu0 %v363
        %380 = vmatpush.bf16.msra.mxu0 %v362
        %381 = vmatmul.bf16.gmra.mxu0 %v371
        %v382 = vpop.f32.mrf.mxu0
        %v383 = vadd.f32 %v343, %v382
        %v384 = vpop.f32.mrf.mxu0
        %385 = vdwg.mxu0
        %v386 = vld [vmem:[%s2] sm:$0x1]
        %v388 = vperm.slane %v386, 0
        %v390 = vadd.f32 %v383, %v388
        %vm391 = vcmask 257024
        %v392 = vsel %vm391, %v390, 0.0
        %393 = vadd.xlane.f32.xlu0 %v392
        %v394 = vpop.xlane.xlu0 %393
        %v395 = vrcp.pop 32.0
        %v396 = vmul.f32 32.0, %v395
        %v397 = vsub.f32 1.0, %v396
        %v398 = vmul.f32 %v395, %v397
        %v399 = vadd.f32 %v395, %v398
        %vm400 = vweird.f32 %v395
        %v401 = vsel %vm400, %v395, %v399
        %v402 = vmul.f32 %v394, %v401
        %v403 = vsub.f32 %v390, %v402
        %v404 = vmul.f32 %v403, %v403
        %v405 = vsel %vm391, %v404, 0.0
        %406 = vadd.xlane.f32.xlu0 %v405
        %v407 = vpop.xlane.xlu0 %406
        %v408 = vmul.f32 %v407, %v401
        %v409 = vadd.f32 %v408, 1e-05
        %v410 = vrsqrt.pop %v409
        %v411 = vmul.f32 %v410, %v409
        %v412 = vmul.f32 %v411, %v410
        %v413 = vmul.f32 0.5, %v412
        %v414 = vsub.f32 1.5, %v413
        %v415 = vmul.f32 %v410, %v414
        %vm416 = vweird.f32 %v409
        %vm417 = vweird.f32 %v410
        %vm418 = vmor %vm416, %vm417
        %v419 = vsel %vm418, %v410, %v415
        %v420 = vmul.f32 %v403, %v419
        %v421 = vld [vmem:[%s3] sm:$0x1]
        %v423 = vperm.slane %v421, 0
        %v425 = vmul.f32 %v420, %v423
        %v426 = vld [vmem:[%s4] sm:$0x1]
        %v428 = vperm.slane %v426, 0
        %v430 = vadd.f32 %v425, %v428
        %v431 = vpack.c.bf16 %v430, %v430
        %v432 = vld [vmem:[%s5] sm:$0xf]
        %v433 = vld [vmem:[%s5 + $0x4] sm:$0xf]
        %v434 = vld [vmem:[%s5 + $0x8] sm:$0xf]
        %v435 = vld [vmem:[%s5 + $0xc] sm:$0xf]
        %v440 = vunpack.c.l.b16 %v432
        %v441 = vunpack.c.l.b16 %v433
        %v442 = vunpack.c.l.b16 %v434
        %v443 = vunpack.c.l.b16 %v435
        %v444 = vpack.c.b16 %v441, %v440
        %v445 = vpack.c.b16 %v443, %v442
        %vm448 = vcmask 261120
        %v450 = vsel %vm448, %v431, 0
        %452 = vmatpush.bf16.msra.mxu0 0
        %453 = vmatpush.bf16.msra.mxu0 0
        %454 = vmatpush.bf16.msra.mxu0 0
        %455 = vmatpush.bf16.msra.mxu0 0
        %456 = vmatpush.bf16.msra.mxu0 0
        %457 = vmatpush.bf16.msra.mxu0 0
        %458 = vmatpush.bf16.msra.mxu0 %v445
        %459 = vmatpush.bf16.msra.mxu0 %v444
        %460 = vmatmul.bf16.gmra.mxu0 %v450
        %v461 = vpop.f32.mrf.mxu0
        %v462 = vadd.f32 0.0, %v461
        %v463 = vpop.f32.mrf.mxu0
        %464 = vdwg.mxu0
        %v465 = vpack.c.bf16 %v462, %v462
        %vm466 = vcmask 517120
        %467 = vst.msk [vmem:[%s271] sm:$0x3] %vm466, %v465
        %s468 = scalar_lea.vmem %s281, 4
        %v469 = vld [vmem:[%s468] sm:$0x3]
        %v470 = vld [vmem:[%s1] sm:$0xf]
        %v471 = vld [vmem:[%s1 + $0x4] sm:$0xf]
        %v472 = vld [vmem:[%s1 + $0x8] sm:$0xf]
        %v473 = vld [vmem:[%s1 + $0xc] sm:$0xf]
        %v474 = vld [vmem:[%s1 + $0x10] sm:$0xf]
        %v475 = vld [vmem:[%s1 + $0x14] sm:$0xf]
        %v476 = vld [vmem:[%s1 + $0x18] sm:$0xf]
        %v477 = vld [vmem:[%s1 + $0x1c] sm:$0xf]
        %s478 = scalar_lea.vmem %s281, 6
        %v479 = vld [vmem:[%s478] sm:$0x3]
        %v480 = vld [vmem:[%s296] sm:$0xf]
        %v481 = vld [vmem:[%s296 + $0x4] sm:$0xf]
        %v482 = vld [vmem:[%s296 + $0x8] sm:$0xf]
        %v483 = vld [vmem:[%s296 + $0xc] sm:$0xf]
        %v484 = vld [vmem:[%s296 + $0x10] sm:$0xf]
        %v485 = vld [vmem:[%s296 + $0x14] sm:$0xf]
        %v486 = vld [vmem:[%s296 + $0x18] sm:$0xf]
        %v487 = vld [vmem:[%s296 + $0x1c] sm:$0xf]
        %v496 = vunpack.c.l.b16 %v480
        %v497 = vunpack.c.l.b16 %v481
        %v498 = vunpack.c.l.b16 %v482
        %v499 = vunpack.c.l.b16 %v483
        %v500 = vunpack.c.l.b16 %v484
        %v501 = vunpack.c.l.b16 %v485
        %v502 = vunpack.c.l.b16 %v486
        %v503 = vunpack.c.l.b16 %v487
        %v504 = vpack.c.b16 %v497, %v496
        %v505 = vpack.c.b16 %v499, %v498
        %v506 = vpack.c.b16 %v501, %v500
        %v507 = vpack.c.b16 %v503, %v502
        %v513 = vsel %vm329, %v479, 0
        %515 = vmatpush.bf16.msra.mxu0 0
        %516 = vmatpush.bf16.msra.mxu0 0
        %517 = vmatpush.bf16.msra.mxu0 0
        %518 = vmatpush.bf16.msra.mxu0 0
        %519 = vmatpush.bf16.msra.mxu0 %v507
        %520 = vmatpush.bf16.msra.mxu0 %v506
        %521 = vmatpush.bf16.msra.mxu0 %v505
        %522 = vmatpush.bf16.msra.mxu0 %v504
        %523 = vmatmul.bf16.gmra.mxu0 %v513
        %v524 = vpop.f32.mrf.mxu0
        %v525 = vadd.f32 0.0, %v524
        %v526 = vpop.f32.mrf.mxu0
        %527 = vdwg.mxu0
        %v536 = vunpack.c.l.b16 %v470
        %v537 = vunpack.c.l.b16 %v471
        %v538 = vunpack.c.l.b16 %v472
        %v539 = vunpack.c.l.b16 %v473
        %v540 = vunpack.c.l.b16 %v474
        %v541 = vunpack.c.l.b16 %v475
        %v542 = vunpack.c.l.b16 %v476
        %v543 = vunpack.c.l.b16 %v477
        %v544 = vpack.c.b16 %v537, %v536
        %v545 = vpack.c.b16 %v539, %v538
        %v546 = vpack.c.b16 %v541, %v540
        %v547 = vpack.c.b16 %v543, %v542
        %v553 = vsel %vm329, %v469, 0
        %555 = vmatpush.bf16.msra.mxu0 0
        %556 = vmatpush.bf16.msra.mxu0 0
        %557 = vmatpush.bf16.msra.mxu0 0
        %558 = vmatpush.bf16.msra.mxu0 0
        %559 = vmatpush.bf16.msra.mxu0 %v547
        %560 = vmatpush.bf16.msra.mxu0 %v546
        %561 = vmatpush.bf16.msra.mxu0 %v545
        %562 = vmatpush.bf16.msra.mxu0 %v544
        %563 = vmatmul.bf16.gmra.mxu0 %v553
        %v564 = vpop.f32.mrf.mxu0
        %v565 = vadd.f32 %v525, %v564
        %v566 = vpop.f32.mrf.mxu0
        %567 = vdwg.mxu0
        %v568 = vld [vmem:[%s2] sm:$0x1]
        %v570 = vperm.slane %v568, 0
        %v572 = vadd.f32 %v565, %v570
        %v573 = vsel %vm391, %v572, 0.0
        %574 = vadd.xlane.f32.xlu0 %v573
        %v575 = vpop.xlane.xlu0 %574
        %v576 = vmul.f32 %v575, %v401
        %v577 = vsub.f32 %v572, %v576
        %v578 = vmul.f32 %v577, %v577
        %v579 = vsel %vm391, %v578, 0.0
        %580 = vadd.xlane.f32.xlu0 %v579
        %v581 = vpop.xlane.xlu0 %580
        %v582 = vmul.f32 %v581, %v401
        %v583 = vadd.f32 %v582, 1e-05
        %v584 = vrsqrt.pop %v583
        %v585 = vmul.f32 %v584, %v583
        %v586 = vmul.f32 %v585, %v584
        %v587 = vmul.f32 0.5, %v586
        %v588 = vsub.f32 1.5, %v587
        %v589 = vmul.f32 %v584, %v588
        %vm590 = vweird.f32 %v583
        %vm591 = vweird.f32 %v584
        %vm592 = vmor %vm590, %vm591
        %v593 = vsel %vm592, %v584, %v589
        %v594 = vmul.f32 %v577, %v593
        %v595 = vld [vmem:[%s3] sm:$0x1]
        %v597 = vperm.slane %v595, 0
        %v599 = vmul.f32 %v594, %v597
        %v600 = vld [vmem:[%s4] sm:$0x1]
        %v602 = vperm.slane %v600, 0
        %v604 = vadd.f32 %v599, %v602
        %v605 = vpack.c.bf16 %v604, %v604
        %v606 = vld [vmem:[%s5] sm:$0xf]
        %v607 = vld [vmem:[%s5 + $0x4] sm:$0xf]
        %v608 = vld [vmem:[%s5 + $0x8] sm:$0xf]
        %v609 = vld [vmem:[%s5 + $0xc] sm:$0xf]
        %v614 = vunpack.c.l.b16 %v606
        %v615 = vunpack.c.l.b16 %v607
        %v616 = vunpack.c.l.b16 %v608
        %v617 = vunpack.c.l.b16 %v609
        %v618 = vpack.c.b16 %v615, %v614
        %v619 = vpack.c.b16 %v617, %v616
        %v623 = vsel %vm448, %v605, 0
        %625 = vmatpush.bf16.msra.mxu0 0
        %626 = vmatpush.bf16.msra.mxu0 0
        %627 = vmatpush.bf16.msra.mxu0 0
        %628 = vmatpush.bf16.msra.mxu0 0
        %629 = vmatpush.bf16.msra.mxu0 0
        %630 = vmatpush.bf16.msra.mxu0 0
        %631 = vmatpush.bf16.msra.mxu0 %v619
        %632 = vmatpush.bf16.msra.mxu0 %v618
        %633 = vmatmul.bf16.gmra.mxu0 %v623
        %v634 = vpop.f32.mrf.mxu0
        %v635 = vadd.f32 0.0, %v634
        %v636 = vpop.f32.mrf.mxu0
        %637 = vdwg.mxu0
        %v638 = vpack.c.bf16 %v635, %v635
        %s639 = scalar_lea.vmem %s271, 2 [#allocation2]
        %640 = vst.msk [vmem:[%s639] sm:$0x3] %vm466, %v638
        %s641 = scalar_lea.vmem %s281, 8
        %v642 = vld [vmem:[%s641] sm:$0x3]
        %v643 = vld [vmem:[%s1] sm:$0xf]
        %v644 = vld [vmem:[%s1 + $0x4] sm:$0xf]
        %v645 = vld [vmem:[%s1 + $0x8] sm:$0xf]
        %v646 = vld [vmem:[%s1 + $0xc] sm:$0xf]
        %v647 = vld [vmem:[%s1 + $0x10] sm:$0xf]
        %v648 = vld [vmem:[%s1 + $0x14] sm:$0xf]
        %v649 = vld [vmem:[%s1 + $0x18] sm:$0xf]
        %v650 = vld [vmem:[%s1 + $0x1c] sm:$0xf]
        %s651 = scalar_lea.vmem %s281, 10
        %v652 = vld [vmem:[%s651] sm:$0x3]
        %v653 = vld [vmem:[%s296] sm:$0xf]
        %v654 = vld [vmem:[%s296 + $0x4] sm:$0xf]
        %v655 = vld [vmem:[%s296 + $0x8] sm:$0xf]
        %v656 = vld [vmem:[%s296 + $0xc] sm:$0xf]
        %v657 = vld [vmem:[%s296 + $0x10] sm:$0xf]
        %v658 = vld [vmem:[%s296 + $0x14] sm:$0xf]
        %v659 = vld [vmem:[%s296 + $0x18] sm:$0xf]
        %v660 = vld [vmem:[%s296 + $0x1c] sm:$0xf]
        %v669 = vunpack.c.l.b16 %v653
        %v670 = vunpack.c.l.b16 %v654
        %v671 = vunpack.c.l.b16 %v655
        %v672 = vunpack.c.l.b16 %v656
        %v673 = vunpack.c.l.b16 %v657
        %v674 = vunpack.c.l.b16 %v658
        %v675 = vunpack.c.l.b16 %v659
        %v676 = vunpack.c.l.b16 %v660
        %v677 = vpack.c.b16 %v670, %v669
        %v678 = vpack.c.b16 %v672, %v671
        %v679 = vpack.c.b16 %v674, %v673
        %v680 = vpack.c.b16 %v676, %v675
        %v686 = vsel %vm329, %v652, 0
        %688 = vmatpush.bf16.msra.mxu0 0
        %689 = vmatpush.bf16.msra.mxu0 0
        %690 = vmatpush.bf16.msra.mxu0 0
        %691 = vmatpush.bf16.msra.mxu0 0
        %692 = vmatpush.bf16.msra.mxu0 %v680
        %693 = vmatpush.bf16.msra.mxu0 %v679
        %694 = vmatpush.bf16.msra.mxu0 %v678
        %695 = vmatpush.bf16.msra.mxu0 %v677
        %696 = vmatmul.bf16.gmra.mxu0 %v686
        %v697 = vpop.f32.mrf.mxu0
        %v698 = vadd.f32 0.0, %v697
        %v699 = vpop.f32.mrf.mxu0
        %700 = vdwg.mxu0
        %v709 = vunpack.c.l.b16 %v643
        %v710 = vunpack.c.l.b16 %v644
        %v711 = vunpack.c.l.b16 %v645
        %v712 = vunpack.c.l.b16 %v646
        %v713 = vunpack.c.l.b16 %v647
        %v714 = vunpack.c.l.b16 %v648
        %v715 = vunpack.c.l.b16 %v649
        %v716 = vunpack.c.l.b16 %v650
        %v717 = vpack.c.b16 %v710, %v709
        %v718 = vpack.c.b16 %v712, %v711
        %v719 = vpack.c.b16 %v714, %v713
        %v720 = vpack.c.b16 %v716, %v715
        %v726 = vsel %vm329, %v642, 0
        %728 = vmatpush.bf16.msra.mxu0 0
        %729 = vmatpush.bf16.msra.mxu0 0
        %730 = vmatpush.bf16.msra.mxu0 0
        %731 = vmatpush.bf16.msra.mxu0 0
        %732 = vmatpush.bf16.msra.mxu0 %v720
        %733 = vmatpush.bf16.msra.mxu0 %v719
        %734 = vmatpush.bf16.msra.mxu0 %v718
        %735 = vmatpush.bf16.msra.mxu0 %v717
        %736 = vmatmul.bf16.gmra.mxu0 %v726
        %v737 = vpop.f32.mrf.mxu0
        %v738 = vadd.f32 %v698, %v737
        %v739 = vpop.f32.mrf.mxu0
        %740 = vdwg.mxu0
        %v741 = vld [vmem:[%s2] sm:$0x1]
        %v743 = vperm.slane %v741, 0
        %v745 = vadd.f32 %v738, %v743
        %v746 = vsel %vm391, %v745, 0.0
        %747 = vadd.xlane.f32.xlu0 %v746
        %v748 = vpop.xlane.xlu0 %747
        %v749 = vmul.f32 %v748, %v401
        %v750 = vsub.f32 %v745, %v749
        %v751 = vmul.f32 %v750, %v750
        %v752 = vsel %vm391, %v751, 0.0
        %753 = vadd.xlane.f32.xlu0 %v752
        %v754 = vpop.xlane.xlu0 %753
        %v755 = vmul.f32 %v754, %v401
        %v756 = vadd.f32 %v755, 1e-05
        %v757 = vrsqrt.pop %v756
        %v758 = vmul.f32 %v757, %v756
        %v759 = vmul.f32 %v758, %v757
        %v760 = vmul.f32 0.5, %v759
        %v761 = vsub.f32 1.5, %v760
        %v762 = vmul.f32 %v757, %v761
        %vm763 = vweird.f32 %v756
        %vm764 = vweird.f32 %v757
        %vm765 = vmor %vm763, %vm764
        %v766 = vsel %vm765, %v757, %v762
        %v767 = vmul.f32 %v750, %v766
        %v768 = vld [vmem:[%s3] sm:$0x1]
        %v770 = vperm.slane %v768, 0
        %v772 = vmul.f32 %v767, %v770
        %v773 = vld [vmem:[%s4] sm:$0x1]
        %v775 = vperm.slane %v773, 0
        %v777 = vadd.f32 %v772, %v775
        %v778 = vpack.c.bf16 %v777, %v777
        %v779 = vld [vmem:[%s5] sm:$0xf]
        %v780 = vld [vmem:[%s5 + $0x4] sm:$0xf]
        %v781 = vld [vmem:[%s5 + $0x8] sm:$0xf]
        %v782 = vld [vmem:[%s5 + $0xc] sm:$0xf]
        %v787 = vunpack.c.l.b16 %v779
        %v788 = vunpack.c.l.b16 %v780
        %v789 = vunpack.c.l.b16 %v781
        %v790 = vunpack.c.l.b16 %v782
        %v791 = vpack.c.b16 %v788, %v787
        %v792 = vpack.c.b16 %v790, %v789
        %v796 = vsel %vm448, %v778, 0
        %798 = vmatpush.bf16.msra.mxu0 0
        %799 = vmatpush.bf16.msra.mxu0 0
        %800 = vmatpush.bf16.msra.mxu0 0
        %801 = vmatpush.bf16.msra.mxu0 0
        %802 = vmatpush.bf16.msra.mxu0 0
        %803 = vmatpush.bf16.msra.mxu0 0
        %804 = vmatpush.bf16.msra.mxu0 %v792
        %805 = vmatpush.bf16.msra.mxu0 %v791
        %806 = vmatmul.bf16.gmra.mxu0 %v796
        %v807 = vpop.f32.mrf.mxu0
        %v808 = vadd.f32 0.0, %v807
        %v809 = vpop.f32.mrf.mxu0
        %810 = vdwg.mxu0
        %v811 = vpack.c.bf16 %v808, %v808
        %s812 = scalar_lea.vmem %s271, 4 [#allocation2]
        %813 = vst.msk [vmem:[%s812] sm:$0x3] %vm466, %v811
        %s814 = scalar_lea.vmem %s281, 12
        %v815 = vld [vmem:[%s814] sm:$0x3]
        %v816 = vld [vmem:[%s1] sm:$0xf]
        %v817 = vld [vmem:[%s1 + $0x4] sm:$0xf]
        %v818 = vld [vmem:[%s1 + $0x8] sm:$0xf]
        %v819 = vld [vmem:[%s1 + $0xc] sm:$0xf]
        %v820 = vld [vmem:[%s1 + $0x10] sm:$0xf]
        %v821 = vld [vmem:[%s1 + $0x14] sm:$0xf]
        %v822 = vld [vmem:[%s1 + $0x18] sm:$0xf]
        %v823 = vld [vmem:[%s1 + $0x1c] sm:$0xf]
        %s824 = scalar_lea.vmem %s281, 14
        %v825 = vld [vmem:[%s824] sm:$0x3]
        %v826 = vld [vmem:[%s296] sm:$0xf]
        %v827 = vld [vmem:[%s296 + $0x4] sm:$0xf]
        %v828 = vld [vmem:[%s296 + $0x8] sm:$0xf]
        %v829 = vld [vmem:[%s296 + $0xc] sm:$0xf]
        %v830 = vld [vmem:[%s296 + $0x10] sm:$0xf]
        %v831 = vld [vmem:[%s296 + $0x14] sm:$0xf]
        %v832 = vld [vmem:[%s296 + $0x18] sm:$0xf]
        %v833 = vld [vmem:[%s296 + $0x1c] sm:$0xf]
        %v842 = vunpack.c.l.b16 %v826
        %v843 = vunpack.c.l.b16 %v827
        %v844 = vunpack.c.l.b16 %v828
        %v845 = vunpack.c.l.b16 %v829
        %v846 = vunpack.c.l.b16 %v830
        %v847 = vunpack.c.l.b16 %v831
        %v848 = vunpack.c.l.b16 %v832
        %v849 = vunpack.c.l.b16 %v833
        %v850 = vpack.c.b16 %v843, %v842
        %v851 = vpack.c.b16 %v845, %v844
        %v852 = vpack.c.b16 %v847, %v846
        %v853 = vpack.c.b16 %v849, %v848
        %v859 = vsel %vm329, %v825, 0
        %861 = vmatpush.bf16.msra.mxu0 0
        %862 = vmatpush.bf16.msra.mxu0 0
        %863 = vmatpush.bf16.msra.mxu0 0
        %864 = vmatpush.bf16.msra.mxu0 0
        %865 = vmatpush.bf16.msra.mxu0 %v853
        %866 = vmatpush.bf16.msra.mxu0 %v852
        %867 = vmatpush.bf16.msra.mxu0 %v851
        %868 = vmatpush.bf16.msra.mxu0 %v850
        %869 = vmatmul.bf16.gmra.mxu0 %v859
        %v870 = vpop.f32.mrf.mxu0
        %v871 = vadd.f32 0.0, %v870
        %v872 = vpop.f32.mrf.mxu0
        %873 = vdwg.mxu0
        %v882 = vunpack.c.l.b16 %v816
        %v883 = vunpack.c.l.b16 %v817
        %v884 = vunpack.c.l.b16 %v818
        %v885 = vunpack.c.l.b16 %v819
        %v886 = vunpack.c.l.b16 %v820
        %v887 = vunpack.c.l.b16 %v821
        %v888 = vunpack.c.l.b16 %v822
        %v889 = vunpack.c.l.b16 %v823
        %v890 = vpack.c.b16 %v883, %v882
        %v891 = vpack.c.b16 %v885, %v884
        %v892 = vpack.c.b16 %v887, %v886
        %v893 = vpack.c.b16 %v889, %v888
        %v899 = vsel %vm329, %v815, 0
        %901 = vmatpush.bf16.msra.mxu0 0
        %902 = vmatpush.bf16.msra.mxu0 0
        %903 = vmatpush.bf16.msra.mxu0 0
        %904 = vmatpush.bf16.msra.mxu0 0
        %905 = vmatpush.bf16.msra.mxu0 %v893
        %906 = vmatpush.bf16.msra.mxu0 %v892
        %907 = vmatpush.bf16.msra.mxu0 %v891
        %908 = vmatpush.bf16.msra.mxu0 %v890
        %909 = vmatmul.bf16.gmra.mxu0 %v899
        %v910 = vpop.f32.mrf.mxu0
        %v911 = vadd.f32 %v871, %v910
        %v912 = vpop.f32.mrf.mxu0
        %913 = vdwg.mxu0
        %v914 = vld [vmem:[%s2] sm:$0x1]
        %v916 = vperm.slane %v914, 0
        %v918 = vadd.f32 %v911, %v916
        %v919 = vsel %vm391, %v918, 0.0
        %920 = vadd.xlane.f32.xlu0 %v919
        %v921 = vpop.xlane.xlu0 %920
        %v922 = vmul.f32 %v921, %v401
        %v923 = vsub.f32 %v918, %v922
        %v924 = vmul.f32 %v923, %v923
        %v925 = vsel %vm391, %v924, 0.0
        %926 = vadd.xlane.f32.xlu0 %v925
        %v927 = vpop.xlane.xlu0 %926
        %v928 = vmul.f32 %v927, %v401
        %v929 = vadd.f32 %v928, 1e-05
        %v930 = vrsqrt.pop %v929
        %v931 = vmul.f32 %v930, %v929
        %v932 = vmul.f32 %v931, %v930
        %v933 = vmul.f32 0.5, %v932
        %v934 = vsub.f32 1.5, %v933
        %v935 = vmul.f32 %v930, %v934
        %vm936 = vweird.f32 %v929
        %vm937 = vweird.f32 %v930
        %vm938 = vmor %vm936, %vm937
        %v939 = vsel %vm938, %v930, %v935
        %v940 = vmul.f32 %v923, %v939
        %v941 = vld [vmem:[%s3] sm:$0x1]
        %v943 = vperm.slane %v941, 0
        %v945 = vmul.f32 %v940, %v943
        %v946 = vld [vmem:[%s4] sm:$0x1]
        %v948 = vperm.slane %v946, 0
        %v950 = vadd.f32 %v945, %v948
        %v951 = vpack.c.bf16 %v950, %v950
        %v952 = vld [vmem:[%s5] sm:$0xf]
        %v953 = vld [vmem:[%s5 + $0x4] sm:$0xf]
        %v954 = vld [vmem:[%s5 + $0x8] sm:$0xf]
        %v955 = vld [vmem:[%s5 + $0xc] sm:$0xf]
        %v960 = vunpack.c.l.b16 %v952
        %v961 = vunpack.c.l.b16 %v953
        %v962 = vunpack.c.l.b16 %v954
        %v963 = vunpack.c.l.b16 %v955
        %v964 = vpack.c.b16 %v961, %v960
        %v965 = vpack.c.b16 %v963, %v962
        %v969 = vsel %vm448, %v951, 0
        %971 = vmatpush.bf16.msra.mxu0 0
        %972 = vmatpush.bf16.msra.mxu0 0
        %973 = vmatpush.bf16.msra.mxu0 0
        %974 = vmatpush.bf16.msra.mxu0 0
        %975 = vmatpush.bf16.msra.mxu0 0
        %976 = vmatpush.bf16.msra.mxu0 0
        %977 = vmatpush.bf16.msra.mxu0 %v965
        %978 = vmatpush.bf16.msra.mxu0 %v964
        %979 = vmatmul.bf16.gmra.mxu0 %v969
        %v980 = vpop.f32.mrf.mxu0
        %v981 = vadd.f32 0.0, %v980
        %v982 = vpop.f32.mrf.mxu0
        %983 = vdwg.mxu0
        %v984 = vpack.c.bf16 %v981, %v981
        %s985 = scalar_lea.vmem %s271, 6 [#allocation2]
        %986 = vst.msk [vmem:[%s985] sm:$0x3] %vm466, %v984
        %s987 = sand.u32 %s175, 1
        %s988 = scalar_lea.sflag [#allocation3], %s987
        %s989 = sand.u32 %s175, 1
        %s990 = smul.addr %s989, 8
        %s991 = scalar_lea.vmem [#allocation2], %s990
        // Predicated region
        $region45: #{tpu_custom_call.1} parent=43 // pred_check
          %p992 = pneg %p185
        $region46: #{tpu_custom_call.1} parent=43 // pred_check_branch
          %994 = sbr.rel (%p992) target = $region48
        $region47: #{tpu_custom_call.1} parent=43 // pred_region
          %s995 = smul.u32 4, %s25
          %997 = vsyncadd %s988, 0
          %s998 = smul.addr %s24, 4
          %s999 = sadd.s32 %s995, %s998
          %s1000 = smul.addr %s999, 2
          %s1001 = scalar_lea.hbm %s6, %s1000
          %s1002 = sshll.u32 %s991, 4
          %s1003 = int_to_ptr.vmem [resolvable:$true] %s1002
          %s1004 = sshll.u32 %s1001, 4
          %s1005 = int_to_ptr.hbm [resolvable:$true] %s1004
          %1010 = dma.vmem_to_hbm [thread:$0]  %s1003, 128, %s1005, %s988, 32, 32, 2
        $region48: #{tpu_custom_call.1} parent=43 // pred_fallthru
          _
      $region44: #{tpu_custom_call.1} parent=5 // pred_fallthru
        _
      %p1011 = scmp.le.s32.totalorder 2, %s15
      // Predicated region
      $region49: #{tpu_custom_call.1} parent=5 // pred_check
        %p1012 = pneg %p1011
      $region50: #{tpu_custom_call.1} parent=5 // pred_check_branch
        %1014 = sbr.rel (%p1012) target = $region52
      $region51: #{tpu_custom_call.1} parent=5 // pred_region
        %s1015 = ssub.s32 %s15, 2
        // Predicated region
        $region53: #{tpu_custom_call.1} parent=51 // pred_check
          %p1016 = pneg %p191
        $region54: #{tpu_custom_call.1} parent=51 // pred_check_branch
          %1018 = sbr.rel (%p1016) target = $region56
        $region55: #{tpu_custom_call.1} parent=51 // pred_region
          %s1019 = sand.u32 %s176, 1
          %s1020 = scalar_lea.sflag [#allocation3], %s1019
          %s1021 = sand.u32 %s176, 1
          %s1022 = smul.addr %s1021, 8
          %s1023 = scalar_lea.vmem [#allocation2], %s1022
          %1025 = dma.done %s1020, 128
        $region56: #{tpu_custom_call.1} parent=51 // pred_fallthru
          _
      $region52: #{tpu_custom_call.1} parent=5 // pred_fallthru
        _
    $region6: #{tpu_custom_call.1} parent=1 // loop_footer
      %s19 = sadd.s32 1, %s15
    $region7: #{tpu_custom_call.1} parent=1 // loop_footer_branch
      %14 = sbr.rel target = $region3
    $region8: #{tpu_custom_call.1} parent=1 // loop_exit
      _
    %1026 = vsyncpa [#allocation3], 1
    %s1027 = scalar_lea.sflag [#allocation3], 1
    %1028 = vsyncpa %s1027, 1

</llo_original>
